<compile_context>
chip_gen: v5e
topology: v5e:2x2
jax: 0.10.0
libtpu: 0.0.40
codegen_flags: <defaults>
</compile_context>

<pallas_src>
import math
from functools import partial

import jax
import jax.numpy as jnp
from jax.experimental import pallas as pl
from jax.experimental.pallas import tpu as pltpu


# ----------------------------------------------------------------------------- #
# Numerics knobs
# ----------------------------------------------------------------------------- #
# bf16 inputs to every MXU matmul, f32 accumulation.  Set to jnp.float32 for exact
# f32 parity with the PyTorch module (halves MXU rate / doubles weight traffic).
MATMUL_DTYPE = jnp.bfloat16
# tanh-approximate GELU runs on the EUP (separate VLIW slot, effectively free once
# the kernel is VALU-bound); deviates from F.gelu(approximate='none') by ~1e-3.
GELU_TANH_APPROX = True


def _mm(a, b):
    """MXU matmul with configurable input dtype and f32 accumulation."""
    return jnp.dot(a.astype(MATMUL_DTYPE), b.astype(MATMUL_DTYPE),
                   preferred_element_type=jnp.float32)


def _erf(x):
    # Abramowitz & Stegun 7.1.26 rational approximation, max abs err ~1.5e-7.
    a1, a2, a3, a4, a5 = 0.254829592, -0.284496736, 1.421413741, -1.453152027, 1.061405429
    p = 0.3275911
    s = jnp.where(x >= 0.0, 1.0, -1.0)
    ax = jnp.abs(x)
    t = 1.0 / (1.0 + p * ax)
    poly = ((((a5 * t + a4) * t + a3) * t + a2) * t + a1) * t
    return s * (1.0 - poly * jnp.exp(-ax * ax))


def _gelu(x):
    if GELU_TANH_APPROX:
        c = math.sqrt(2.0 / math.pi)
        return 0.5 * x * (1.0 + jnp.tanh(c * (x + 0.044715 * x * x * x)))
    return 0.5 * x * (1.0 + _erf(x * (1.0 / math.sqrt(2.0))))


def _layernorm(y, gamma, beta, eps=1e-5):
    mean = jnp.mean(y, axis=-1, keepdims=True)
    var = jnp.mean(jnp.square(y - mean), axis=-1, keepdims=True)
    return (y - mean) * jax.lax.rsqrt(var + eps) * gamma + beta


# ----------------------------------------------------------------------------- #
# Dilated depthwise conv: two interchangeable implementations of one layer's conv.
#   reference: static slices + concat with zeros (plain JAX, used for validation)
#   kernel:    zero-padded VMEM halo buffer, each tap is a static sublane slice
# ----------------------------------------------------------------------------- #
def _shift_rows(xm, off):
    """result[t] = xm[t + off], zero outside [0, T).  `off` is a compile-time int."""
    T, C = xm.shape
    if off == 0:
        return xm
    if off >= T or off <= -T:
        return None
    z = jnp.zeros((abs(off), C), xm.dtype)
    if off > 0:
        return jnp.concatenate([xm[off:, :], z], axis=0)
    return jnp.concatenate([z, xm[:T + off, :]], axis=0)


def _dw_conv_reference(xm, wdw, bdw, dil, kernel_size):
    T, C = xm.shape
    center = (kernel_size - 1) // 2
    y = jnp.zeros((T, C), jnp.float32) + bdw
    for k in range(kernel_size):
        shifted = _shift_rows(xm, (k - center) * dil)
        if shifted is not None:
            y = y + shifted * wdw[k:k + 1, :]
    return y


def _make_halo_dw_conv(pad_ref, halo):
    """Depthwise dilated conv using a zero-initialized (T + 2*halo, C) VMEM scratch."""
    def dw_conv(xm, wdw, bdw, dil, kernel_size):
        T, C = xm.shape
        center = (kernel_size - 1) // 2
        pad_ref[halo:halo + T, :] = xm                 # halo rows stay zero
        y = jnp.zeros((T, C), jnp.float32) + bdw
        for k in range(kernel_size):
            off = (k - center) * dil
            if off <= -T or off >= T:                  # tap entirely outside -> 0
                continue
            y = y + pad_ref[halo + off:halo + off + T, :] * wdw[k:k + 1, :]
        return y
    return dw_conv


# ----------------------------------------------------------------------------- #
# Shared math for one fused "pre -> DDSConv(n_layers) -> proj" stack (2-D operands).
# Used by the Pallas kernel body AND by the plain-JAX reference.
# ----------------------------------------------------------------------------- #
def _dds_block_math(x_in, add, m, wpre, bpre, layer_params, wproj, bproj, dw_conv,
                    *, kernel_size, dilations):
    T, Cin = x_in.shape

    if Cin == 1:                                       # 1-channel pre: broadcast, no MXU
        h = x_in * wpre + bpre
    else:
        h = _mm(x_in, wpre) + bpre
    h = h + add                                        # conditioning (broadcasts if (1,C))

    for dil, (wdw, bdw, g1, b1, wl, bl, g2, b2) in zip(dilations, layer_params):
        xm = h * m
        y = dw_conv(xm, wdw, bdw, dil, kernel_size)
        y = _layernorm(y, g1, b1)
        y = _gelu(y)
        y = _mm(y, wl) + bl
        y = _layernorm(y, g2, b2)
        y = _gelu(y)
        h = h + y                                      # dropout p=0.0 -> identity

    h = h * m
    return (_mm(h, wproj) + bproj) * m


def _fused_dds_kernel(x_ref, add_ref, m_ref, wpre_ref, bpre_ref,
                      wdw_ref, bdw_ref, g1_ref, b1_ref,
                      wl_ref, bl_ref, g2_ref, b2_ref,
                      wproj_ref, bproj_ref, o_ref, pad_ref,
                      *, kernel_size, dilations, halo):
    # Zero only the halo rows (centre rows are overwritten by every layer's store).
    if halo > 0:
        C = pad_ref.shape[1]
        T = pad_ref.shape[0] - 2 * halo
        zrows = jnp.zeros((halo, C), jnp.float32)
        pad_ref[0:halo, :] = zrows
        pad_ref[halo + T:halo + T + halo, :] = zrows

    dw_conv = _make_halo_dw_conv(pad_ref, halo)
    L = len(dilations)
    layer_params = [(wdw_ref[l], bdw_ref[l], g1_ref[l], b1_ref[l],
                     wl_ref[l], bl_ref[l], g2_ref[l], b2_ref[l]) for l in range(L)]
    o_ref[0] = _dds_block_math(
        x_ref[0], add_ref[0], m_ref[0], wpre_ref[...], bpre_ref[...],
        layer_params, wproj_ref[...], bproj_ref[...], dw_conv,
        kernel_size=kernel_size, dilations=dilations)


def fused_pre_dds_proj(p, x_in, add, mask):
    """One pallas_call per DDS stack (pre-Linear + n_layers DDSConv + proj-Linear),
    activations resident in VMEM for the whole stack; grid only over batch."""
    B, T, Cin = x_in.shape
    wpre, bpre = p["pre"]["w"], p["pre"]["b"]
    C = wpre.shape[1]
    dds = p["convs"]
    K, dilations = dds["kernel_size"], dds["dilations"]
    L = len(dilations)
    center = (K - 1) // 2

    # halo = largest in-range tap offset (taps fully outside the sequence are skipped)
    halo = 0
    for dil in dilations:
        for k in range(K):
            off = abs((k - center) * dil)
            if 0 < off < T:
                halo = max(halo, off)

    # sublane-friendly padded proj output (e.g. 3*num_bins-1 = 29 -> 32), sliced in JAX
    wproj, bproj = p["proj"]["w"], p["proj"]["b"]
    Cout = wproj.shape[1]
    Cout_p = ((Cout + 7) // 8) * 8
    if Cout_p != Cout:
        wproj = jnp.pad(wproj, ((0, 0), (0, Cout_p - Cout)))
        bproj = jnp.pad(bproj, (0, Cout_p - Cout))

    aB, aT = add.shape[0], add.shape[1]
    add_map = (lambda b: (b, 0, 0)) if aB == B else (lambda b: (0, 0, 0))

    out = pl.pallas_call(
        partial(_fused_dds_kernel, kernel_size=K, dilations=dilations, halo=halo),
        out_shape=jax.ShapeDtypeStruct((B, T, Cout_p), jnp.float32),
        grid=(B,),
        in_specs=[
            pl.BlockSpec((1, T, Cin), lambda b: (b, 0, 0)),   # x
            pl.BlockSpec((1, aT, C), add_map),                # additive conditioning
            pl.BlockSpec((1, T, 1), lambda b: (b, 0, 0)),     # mask
            pl.BlockSpec((Cin, C), lambda b: (0, 0)),         # pre W
            pl.BlockSpec((1, C), lambda b: (0, 0)),           # pre b
            pl.BlockSpec((L, K, C), lambda b: (0, 0, 0)),     # depthwise W (stacked)
            pl.BlockSpec((L, 1, C), lambda b: (0, 0, 0)),     # depthwise b
            pl.BlockSpec((L, 1, C), lambda b: (0, 0, 0)),     # LN1 gamma
            pl.BlockSpec((L, 1, C), lambda b: (0, 0, 0)),     # LN1 beta
            pl.BlockSpec((L, C, C), lambda b: (0, 0, 0)),     # pointwise W (stacked)
            pl.BlockSpec((L, 1, C), lambda b: (0, 0, 0)),     # pointwise b
            pl.BlockSpec((L, 1, C), lambda b: (0, 0, 0)),     # LN2 gamma
            pl.BlockSpec((L, 1, C), lambda b: (0, 0, 0)),     # LN2 beta
            pl.BlockSpec((C, Cout_p), lambda b: (0, 0)),      # proj W (padded)
            pl.BlockSpec((1, Cout_p), lambda b: (0, 0)),      # proj b (padded)
        ],
        out_specs=pl.BlockSpec((1, T, Cout_p), lambda b: (b, 0, 0)),
        scratch_shapes=[pltpu.VMEM((T + 2 * halo, C), jnp.float32)],
        compiler_params=pltpu.CompilerParams(
            dimension_semantics=("parallel",)),               # 2 TensorCores on v7x
    )(x_in, add, mask, wpre, bpre.reshape(1, C),
      dds["w_dw"], dds["b_dw"], dds["g1"], dds["b1"],
      dds["w_lin"], dds["b_lin"], dds["g2"], dds["b2"],
      wproj, bproj.reshape(1, Cout_p))
    return out[..., :Cout] if Cout_p != Cout else out


def ref_pre_dds_proj(p, x_in, add, mask):
    """Plain-JAX (no Pallas) mirror of fused_pre_dds_proj, used for validation."""
    dds = p["convs"]
    L = len(dds["dilations"])
    layer_params = [(dds["w_dw"][l], dds["b_dw"][l], dds["g1"][l], dds["b1"][l],
                     dds["w_lin"][l], dds["b_lin"][l], dds["g2"][l], dds["b2"][l])
                    for l in range(L)]
    wpre = p["pre"]["w"]
    bpre = p["pre"]["b"].reshape(1, -1)
    wproj = p["proj"]["w"]
    bproj = p["proj"]["b"].reshape(1, -1)
    if add.shape[0] != x_in.shape[0]:
        add = jnp.broadcast_to(add, (x_in.shape[0],) + add.shape[1:])
    fn = lambda xb, ab, mb: _dds_block_math(
        xb, ab, mb, wpre, bpre, layer_params, wproj, bproj, _dw_conv_reference,
        kernel_size=dds["kernel_size"], dilations=dds["dilations"])
    return jax.vmap(fn)(x_in, add, mask)


# ----------------------------------------------------------------------------- #
# Small Pallas Linear (used once per forward for the speaker conditioning `cond`)
# ----------------------------------------------------------------------------- #
def _linear_kernel(x_ref, w_ref, b_ref, o_ref):
    o_ref[...] = _mm(x_ref[...], w_ref[...]) + b_ref[...]


def pallas_linear(x, w, b):
    """y = x @ W + b over channels; (B, T) flattened onto the sublane axis."""
    B, T, Cin = x.shape
    Cout = w.shape[1]
    R = B * T
    # TODO(synk): tile rows in chunks (multiples of 8) once B*T grows beyond VMEM.
    out = pl.pallas_call(
        _linear_kernel,
        out_shape=jax.ShapeDtypeStruct((R, Cout), jnp.float32),
        grid=(1,),
        in_specs=[pl.BlockSpec((R, Cin), lambda i: (0, 0)),
                  pl.BlockSpec((Cin, Cout), lambda i: (0, 0)),
                  pl.BlockSpec((1, Cout), lambda i: (0, 0))],
        out_specs=pl.BlockSpec((R, Cout), lambda i: (0, 0)),
        compiler_params=pltpu.CompilerParams(dimension_semantics=("arbitrary",)),
    )(x.reshape(R, Cin), w, b.reshape(1, Cout))
    return out.reshape(B, T, Cout)


# ----------------------------------------------------------------------------- #
# Plain-JAX flow glue (tiny 2-channel compute)
# ----------------------------------------------------------------------------- #
def elementwise_affine_fwd(p, x, mask):
    y = (p["m"] + jnp.exp(p["logs"]) * x) * mask
    logdet = jnp.sum(p["logs"] * mask, axis=(1, 2))
    return y, logdet


def flip_fwd(x):
    return x[..., ::-1], jnp.zeros((x.shape[0],), x.dtype)


def log_flow_fwd(x, mask):
    y = jnp.log(jnp.maximum(x, 1e-5)) * mask
    logdet = jnp.sum(-y, axis=(1, 2))
    return y, logdet


# Rational-quadratic spline (forward, linear tails) -- plain JAX.
# TODO(synk): the per-element bin search/gather over 10 bins acts on the 2-channel flow
# and is negligible compute vs the DDS stacks; left in JAX.
def _rqs_forward(inputs, uw, uh, ud, left, right, bottom, top,
                 min_bin_width=1e-3, min_bin_height=1e-3, min_derivative=1e-3):
    num_bins = uw.shape[-1]

    widths = jax.nn.softmax(uw, axis=-1)
    widths = min_bin_width + (1 - min_bin_width * num_bins) * widths
    cumwidths = jnp.cumsum(widths, axis=-1)
    cumwidths = jnp.pad(cumwidths, [(0, 0)] * (cumwidths.ndim - 1) + [(1, 0)])
    cumwidths = (right - left) * cumwidths + left
    cumwidths = cumwidths.at[..., 0].set(left)
    cumwidths = cumwidths.at[..., -1].set(right)
    widths = cumwidths[..., 1:] - cumwidths[..., :-1]

    derivatives = min_derivative + jax.nn.softplus(ud)

    heights = jax.nn.softmax(uh, axis=-1)
    heights = min_bin_height + (1 - min_bin_height * num_bins) * heights
    cumheights = jnp.cumsum(heights, axis=-1)
    cumheights = jnp.pad(cumheights, [(0, 0)] * (cumheights.ndim - 1) + [(1, 0)])
    cumheights = (top - bottom) * cumheights + bottom
    cumheights = cumheights.at[..., 0].set(bottom)
    cumheights = cumheights.at[..., -1].set(top)
    heights = cumheights[..., 1:] - cumheights[..., :-1]

    bin_loc = cumwidths.at[..., -1].add(1e-6)
    bin_idx = jnp.sum((inputs[..., None] >= bin_loc).astype(jnp.int32), axis=-1) - 1
    bin_idx = jnp.clip(bin_idx, 0, num_bins - 1)[..., None]

    def gather(v):
        return jnp.take_along_axis(v, bin_idx, axis=-1)[..., 0]

    input_cumwidths = gather(cumwidths)
    input_bin_widths = gather(widths)
    input_cumheights = gather(cumheights)
    delta = heights / widths
    input_delta = gather(delta)
    input_derivatives = gather(derivatives)
    input_derivatives_p1 = gather(derivatives[..., 1:])
    input_heights = gather(heights)

    theta = (inputs - input_cumwidths) / input_bin_widths
    t1mt = theta * (1 - theta)
    numerator = input_heights * (input_delta * theta ** 2 + input_derivatives * t1mt)
    denominator = input_delta + (input_derivatives + input_derivatives_p1 - 2 * input_delta) * t1mt
    outputs = input_cumheights + numerator / denominator
    deriv_num = input_delta ** 2 * (input_derivatives_p1 * theta ** 2
                                    + 2 * input_delta * t1mt
                                    + input_derivatives * (1 - theta) ** 2)
    logabsdet = jnp.log(deriv_num) - 2 * jnp.log(denominator)
    return outputs, logabsdet


def unconstrained_rqs_forward(inputs, uw, uh, ud, tail_bound, min_derivative=1e-3):
    inside = (inputs >= -tail_bound) & (inputs <= tail_bound)
    constant = math.log(math.exp(1.0 - min_derivative) - 1.0)
    ud = jnp.pad(ud, [(0, 0)] * (ud.ndim - 1) + [(1, 1)], constant_values=constant)
    # clamp so the discarded outside-tail branch stays NaN-free (safe for autodiff)
    safe_inputs = jnp.clip(inputs, -tail_bound, tail_bound)
    out_s, lad_s = _rqs_forward(safe_inputs, uw, uh, ud,
                                left=-tail_bound, right=tail_bound,
                                bottom=-tail_bound, top=tail_bound)
    outputs = jnp.where(inside, out_s, inputs)
    logabsdet = jnp.where(inside, lad_s, 0.0)
    return outputs, logabsdet


def conv_flow_fwd(p, x, mask, g_ctx, hp):
    num_bins = hp["num_bins"]
    filter_channels = hp["filter_channels"]
    tail_bound = hp["tail_bound"]

    x0, x1 = x[..., :1], x[..., 1:]
    h = fused_pre_dds_proj(p, x0, g_ctx, mask)          # pre -> DDSConv x3 -> proj, masked

    B, T, _ = x0.shape
    h = h.reshape(B, T, 1, 3 * num_bins - 1)
    uw = h[..., :num_bins] / math.sqrt(filter_channels)
    uh = h[..., num_bins:2 * num_bins] / math.sqrt(filter_channels)
    ud = h[..., 2 * num_bins:]

    x1_new, logabsdet = unconstrained_rqs_forward(x1, uw, uh, ud, tail_bound)
    x_out = jnp.concatenate([x0, x1_new], axis=-1) * mask
    logdet = jnp.sum(logabsdet * mask, axis=(1, 2))
    return x_out, logdet


# ----------------------------------------------------------------------------- #
# StochasticDurationPredictor forward (reverse=False / training branch)
# ----------------------------------------------------------------------------- #
def sdp_forward(params, hp, x, x_mask, w, g, e_q):
    B, T, _ = x.shape
    C = hp["filter_channels"]
    zeros_add = jnp.zeros((1, 1, C), jnp.float32)       # broadcast "no conditioning"

    # context encoder: pre -> (+cond(g)) -> DDSConv x3 -> proj, fused into one kernel
    cond_add = (pallas_linear(g, params["cond"]["w"], params["cond"]["b"])
                if g is not None else zeros_add)
    x_ctx = fused_pre_dds_proj(params["main"], x, cond_add, x_mask)

    # posterior encoder over durations w
    h_w = fused_pre_dds_proj(params["post"], w, zeros_add, x_mask)

    e_q = e_q * x_mask          # stand-in for torch.randn(...) * x_mask (noise is an input)
    z_q = e_q
    logdet_tot_q = jnp.zeros((B,), x.dtype)
    g_post = x_ctx + h_w
    for kind, p in params["post_flows"]:
        if kind == "ea":
            z_q, ld = elementwise_affine_fwd(p, z_q, x_mask)
        elif kind == "cf":
            z_q, ld = conv_flow_fwd(p, z_q, x_mask, g_post, hp)
        else:
            z_q, ld = flip_fwd(z_q)
        logdet_tot_q = logdet_tot_q + ld

    z_u, z1 = z_q[..., :1], z_q[..., 1:]
    u = jax.nn.sigmoid(z_u) * x_mask
    z0 = (w - u) * x_mask
    logdet_tot_q = logdet_tot_q + jnp.sum(
        (jax.nn.log_sigmoid(z_u) + jax.nn.log_sigmoid(-z_u)) * x_mask, axis=(1, 2))
    logq = jnp.sum(-0.5 * (math.log(2 * math.pi) + e_q ** 2) * x_mask,
                   axis=(1, 2)) - logdet_tot_q

    logdet_tot = jnp.zeros((B,), x.dtype)
    z0, ld = log_flow_fwd(z0, x_mask)
    logdet_tot = logdet_tot + ld
    z = jnp.concatenate([z0, z1], axis=-1)
    for kind, p in params["flows"]:
        if kind == "ea":
            z, ld = elementwise_affine_fwd(p, z, x_mask)
        elif kind == "cf":
            z, ld = conv_flow_fwd(p, z, x_mask, x_ctx, hp)
        else:
            z, ld = flip_fwd(z)
        logdet_tot = logdet_tot + ld

    nll = jnp.sum(0.5 * (math.log(2 * math.pi) + z ** 2) * x_mask,
                  axis=(1, 2)) - logdet_tot
    return nll + logq


# ----------------------------------------------------------------------------- #
# Deterministic parameter construction (PyTorch-default-style init)
# ----------------------------------------------------------------------------- #
def init_linear(key, cin, cout, zero=False):
    if zero:
        return {"w": jnp.zeros((cin, cout), jnp.float32),
                "b": jnp.zeros((cout,), jnp.float32)}
    k1, k2 = jax.random.split(key)
    s = 1.0 / math.sqrt(cin)
    return {"w": jax.random.uniform(k1, (cin, cout), jnp.float32, -s, s),
            "b": jax.random.uniform(k2, (cout,), jnp.float32, -s, s)}


def init_dds(key, channels, kernel_size, n_layers):
    ks = jax.random.split(key, 4)
    L, K, C = n_layers, kernel_size, channels
    s_conv = 1.0 / math.sqrt(K)        # depthwise fan_in = kernel_size
    s_lin = 1.0 / math.sqrt(C)
    return {
        "kernel_size": K,
        "dilations": tuple(K ** i for i in range(L)),
        "w_dw": jax.random.uniform(ks[0], (L, K, C), jnp.float32, -s_conv, s_conv),
        "b_dw": jax.random.uniform(ks[1], (L, 1, C), jnp.float32, -s_conv, s_conv),
        "g1": jnp.ones((L, 1, C), jnp.float32),
        "b1": jnp.zeros((L, 1, C), jnp.float32),
        "w_lin": jax.random.uniform(ks[2], (L, C, C), jnp.float32, -s_lin, s_lin),
        "b_lin": jax.random.uniform(ks[3], (L, 1, C), jnp.float32, -s_lin, s_lin),
        "g2": jnp.ones((L, 1, C), jnp.float32),
        "b2": jnp.zeros((L, 1, C), jnp.float32),
    }


def init_convflow(key, filter_channels, kernel_size, n_layers, num_bins):
    k1, k2 = jax.random.split(key)
    return {
        "pre": init_linear(k1, 1, filter_channels),
        "convs": init_dds(k2, filter_channels, kernel_size, n_layers),
        # ConvFlow.proj is explicitly zero-initialized in the PyTorch module
        "proj": init_linear(key, filter_channels, num_bins * 3 - 1, zero=True),
    }


def init_ea():
    return {"m": jnp.zeros((1, 1, 2), jnp.float32),
            "logs": jnp.zeros((1, 1, 2), jnp.float32)}


def init_params(key, in_channels, filter_channels, kernel_size, n_flows,
                spk_dim, num_bins):
    keys = jax.random.split(key, 9)
    params = {
        "main": {"pre": init_linear(keys[0], in_channels, filter_channels),
                 "convs": init_dds(keys[1], filter_channels, kernel_size, 3),
                 "proj": init_linear(keys[2], filter_channels, filter_channels)},
        "post": {"pre": init_linear(keys[3], 1, filter_channels),
                 "convs": init_dds(keys[4], filter_channels, kernel_size, 3),
                 "proj": init_linear(keys[5], filter_channels, filter_channels)},
        "cond": init_linear(keys[6], spk_dim, filter_channels),
    }
    flows = [("ea", init_ea())]
    fk = jax.random.split(keys[7], n_flows)
    for i in range(n_flows):
        flows.append(("cf", init_convflow(fk[i], filter_channels, kernel_size, 3, num_bins)))
        flows.append(("flip", None))
    params["flows"] = flows

    post_flows = [("ea", init_ea())]
    pk = jax.random.split(keys[8], 4)
    for i in range(4):
        post_flows.append(("cf", init_convflow(pk[i], filter_channels, kernel_size, 3, num_bins)))
        post_flows.append(("flip", None))
    params["post_flows"] = post_flows
    return params


# ----------------------------------------------------------------------------- #
if __name__ == "__main__":
    B, T = 2, 8
    in_channels = 16
    filter_channels = 32
    kernel_size = 5
    n_flows = 4
    spk_dim = 16
    num_bins = 10
    tail_bound = 5.0

    key = jax.random.PRNGKey(0)
    kp, kx, kg, kw, ke, ka = jax.random.split(key, 6)

    params = init_params(kp, in_channels, filter_channels, kernel_size,
                         n_flows, spk_dim, num_bins)
    hp = {"num_bins": num_bins, "tail_bound": tail_bound,
          "filter_channels": filter_channels}

    # layout: (B, T, C); the PyTorch module's (B, C, T) inputs are transposed.
    x = jax.random.normal(kx, (B, T, in_channels), jnp.float32)
    g = jax.random.normal(kg, (B, T, spk_dim), jnp.float32)
    w_dur = jnp.abs(jax.random.normal(kw, (B, T, 1), jnp.float32)) * 3.0 + 1.0
    e_q = jax.random.normal(ke, (B, T, 2), jnp.float32)   # replaces torch.randn

    lengths = jnp.array([T, T - 2])
    x_mask = (jnp.arange(T)[None, :] < lengths[:, None]).astype(jnp.float32)[..., None]

    # --- unit check: fused Pallas DDS stack vs pure-JAX reference --------------- #
    add_rand = jax.random.normal(ka, (B, T, filter_channels), jnp.float32)
    run_main = jax.jit(lambda a, b, c: fused_pre_dds_proj(params["main"], a, b, c))
    got = jax.block_until_ready(run_main(x, add_rand, x_mask))
    want = ref_pre_dds_proj(params["main"], x, add_rand, x_mask)
    assert got.shape == want.shape
    assert bool(jnp.all(jnp.isfinite(got)))
    assert float(jnp.max(jnp.abs(got - want))) < 2e-2

    zeros_add = jnp.zeros((1, 1, filter_channels), jnp.float32)
    run_post = jax.jit(lambda a, b, c: fused_pre_dds_proj(params["post"], a, b, c))
    got2 = jax.block_until_ready(run_post(w_dur, zeros_add, x_mask))
    want2 = ref_pre_dds_proj(params["post"], w_dur, zeros_add, x_mask)
    assert float(jnp.max(jnp.abs(got2 - want2))) < 2e-2

    # --- full StochasticDurationPredictor forward (training / NLL branch) ------- #
    fwd = jax.jit(partial(sdp_forward, params, hp))
    nll = jax.block_until_ready(fwd(x, x_mask, w_dur, g, e_q))

    assert nll.shape == (B,)
    assert bool(jnp.all(jnp.isfinite(nll)))
    print("KERNEL_OK")
</pallas_src>

<mosaic_0001>
module attributes {stable_mosaic.version = 11 : i64} {
  func.func @_fused_dds_kernel(%arg0: i32, %arg1: memref<1x8x16xf32, #tpu.memory_space<vmem>>, %arg2: memref<1x8x32xf32, #tpu.memory_space<vmem>>, %arg3: memref<1x8x1xf32, #tpu.memory_space<vmem>>, %arg4: memref<16x32xf32, #tpu.memory_space<vmem>>, %arg5: memref<1x32xf32, #tpu.memory_space<vmem>>, %arg6: memref<3x5x32xf32, #tpu.memory_space<vmem>>, %arg7: memref<3x1x32xf32, #tpu.memory_space<vmem>>, %arg8: memref<3x1x32xf32, #tpu.memory_space<vmem>>, %arg9: memref<3x1x32xf32, #tpu.memory_space<vmem>>, %arg10: memref<3x32x32xf32, #tpu.memory_space<vmem>>, %arg11: memref<3x1x32xf32, #tpu.memory_space<vmem>>, %arg12: memref<3x1x32xf32, #tpu.memory_space<vmem>>, %arg13: memref<3x1x32xf32, #tpu.memory_space<vmem>>, %arg14: memref<32x32xf32, #tpu.memory_space<vmem>>, %arg15: memref<1x32xf32, #tpu.memory_space<vmem>>, %arg16: memref<1x8x32xf32, #tpu.memory_space<vmem>>, %arg17: memref<18x32xf32, #tpu.memory_space<vmem>>) attributes {dimension_semantics = [#tpu.dimension_semantics<parallel>], iteration_bounds = array<i64: 2>, scalar_prefetch = 0 : i64, scratch_operands = 1 : i64, tpu.core_type = #tpu.core_type<tc>, window_params = [{transform_indices = @transform_0, window_bounds = array<i64: 1, 8, 16>}, {transform_indices = @transform_1, window_bounds = array<i64: 1, 8, 32>}, {transform_indices = @transform_2, window_bounds = array<i64: 1, 8, 1>}, {pipeline_mode = #tpu.pipeline_mode<synchronous>, transform_indices = @transform_3, window_bounds = array<i64: 16, 32>}, {pipeline_mode = #tpu.pipeline_mode<synchronous>, transform_indices = @transform_4, window_bounds = array<i64: 1, 32>}, {pipeline_mode = #tpu.pipeline_mode<synchronous>, transform_indices = @transform_5, window_bounds = array<i64: 3, 5, 32>}, {pipeline_mode = #tpu.pipeline_mode<synchronous>, transform_indices = @transform_6, window_bounds = array<i64: 3, 1, 32>}, {pipeline_mode = #tpu.pipeline_mode<synchronous>, transform_indices = @transform_7, window_bounds = array<i64: 3, 1, 32>}, {pipeline_mode = #tpu.pipeline_mode<synchronous>, transform_indices = @transform_8, window_bounds = array<i64: 3, 1, 32>}, {pipeline_mode = #tpu.pipeline_mode<synchronous>, transform_indices = @transform_9, window_bounds = array<i64: 3, 32, 32>}, {pipeline_mode = #tpu.pipeline_mode<synchronous>, transform_indices = @transform_10, window_bounds = array<i64: 3, 1, 32>}, {pipeline_mode = #tpu.pipeline_mode<synchronous>, transform_indices = @transform_11, window_bounds = array<i64: 3, 1, 32>}, {pipeline_mode = #tpu.pipeline_mode<synchronous>, transform_indices = @transform_12, window_bounds = array<i64: 3, 1, 32>}, {pipeline_mode = #tpu.pipeline_mode<synchronous>, transform_indices = @transform_13, window_bounds = array<i64: 32, 32>}, {pipeline_mode = #tpu.pipeline_mode<synchronous>, transform_indices = @transform_14, window_bounds = array<i64: 1, 32>}, {transform_indices = @transform_15, window_bounds = array<i64: 1, 8, 32>}]} {
    %cst = arith.constant 0.000000e+00 : f32
    %0 = vector.broadcast %cst : f32 to vector<5x32xf32>
    %c0 = arith.constant 0 : index
    %c0_0 = arith.constant 0 : index
    %1 = vector.load %arg17[%c0, %c0_0] : memref<18x32xf32, #tpu.memory_space<vmem>>, vector<5x32xf32>
    tpu.vector_store %arg17[%c0, %c0_0], %0 {strides = array<i32>} : memref<18x32xf32, #tpu.memory_space<vmem>>, vector<5x32xf32>,
    %c13 = arith.constant 13 : index
    %c0_1 = arith.constant 0 : index
    %2 = vector.load %arg17[%c13, %c0_1] : memref<18x32xf32, #tpu.memory_space<vmem>>, vector<5x32xf32>
    tpu.vector_store %arg17[%c13, %c0_1], %0 {strides = array<i32>} : memref<18x32xf32, #tpu.memory_space<vmem>>, vector<5x32xf32>,
    %c0_2 = arith.constant 0 : index
    %c0_3 = arith.constant 0 : index
    %c0_4 = arith.constant 0 : index
    %3 = vector.load %arg6[%c0_2, %c0_3, %c0_4] : memref<3x5x32xf32, #tpu.memory_space<vmem>>, vector<1x5x32xf32>
    %4 = vector.shape_cast %3 : vector<1x5x32xf32> to vector<5x32xf32>
    %c0_5 = arith.constant 0 : index
    %c0_6 = arith.constant 0 : index
    %c0_7 = arith.constant 0 : index
    %5 = vector.load %arg7[%c0_5, %c0_6, %c0_7] : memref<3x1x32xf32, #tpu.memory_space<vmem>>, vector<1x1x32xf32>
    %6 = vector.shape_cast %5 : vector<1x1x32xf32> to vector<1x32xf32>
    %c0_8 = arith.constant 0 : index
    %c0_9 = arith.constant 0 : index
    %c0_10 = arith.constant 0 : index
    %7 = vector.load %arg8[%c0_8, %c0_9, %c0_10] : memref<3x1x32xf32, #tpu.memory_space<vmem>>, vector<1x1x32xf32>
    %8 = vector.shape_cast %7 : vector<1x1x32xf32> to vector<1x32xf32>
    %c0_11 = arith.constant 0 : index
    %c0_12 = arith.constant 0 : index
    %c0_13 = arith.constant 0 : index
    %9 = vector.load %arg9[%c0_11, %c0_12, %c0_13] : memref<3x1x32xf32, #tpu.memory_space<vmem>>, vector<1x1x32xf32>
    %10 = vector.shape_cast %9 : vector<1x1x32xf32> to vector<1x32xf32>
    %c0_14 = arith.constant 0 : index
    %c0_15 = arith.constant 0 : index
    %c0_16 = arith.constant 0 : index
    %11 = vector.load %arg10[%c0_14, %c0_15, %c0_16] : memref<3x32x32xf32, #tpu.memory_space<vmem>>, vector<1x32x32xf32>
    %12 = vector.shape_cast %11 : vector<1x32x32xf32> to vector<32x32xf32>
    %c0_17 = arith.constant 0 : index
    %c0_18 = arith.constant 0 : index
    %c0_19 = arith.constant 0 : index
    %13 = vector.load %arg11[%c0_17, %c0_18, %c0_19] : memref<3x1x32xf32, #tpu.memory_space<vmem>>, vector<1x1x32xf32>
    %14 = vector.shape_cast %13 : vector<1x1x32xf32> to vector<1x32xf32>
    %c0_20 = arith.constant 0 : index
    %c0_21 = arith.constant 0 : index
    %c0_22 = arith.constant 0 : index
    %15 = vector.load %arg12[%c0_20, %c0_21, %c0_22] : memref<3x1x32xf32, #tpu.memory_space<vmem>>, vector<1x1x32xf32>
    %16 = vector.shape_cast %15 : vector<1x1x32xf32> to vector<1x32xf32>
    %c0_23 = arith.constant 0 : index
    %c0_24 = arith.constant 0 : index
    %c0_25 = arith.constant 0 : index
    %17 = vector.load %arg13[%c0_23, %c0_24, %c0_25] : memref<3x1x32xf32, #tpu.memory_space<vmem>>, vector<1x1x32xf32>
    %18 = vector.shape_cast %17 : vector<1x1x32xf32> to vector<1x32xf32>
    %c1 = arith.constant 1 : index
    %c0_26 = arith.constant 0 : index
    %c0_27 = arith.constant 0 : index
    %19 = vector.load %arg6[%c1, %c0_26, %c0_27] : memref<3x5x32xf32, #tpu.memory_space<vmem>>, vector<1x5x32xf32>
    %20 = vector.shape_cast %19 : vector<1x5x32xf32> to vector<5x32xf32>
    %c1_28 = arith.constant 1 : index
    %c0_29 = arith.constant 0 : index
    %c0_30 = arith.constant 0 : index
    %21 = vector.load %arg7[%c1_28, %c0_29, %c0_30] : memref<3x1x32xf32, #tpu.memory_space<vmem>>, vector<1x1x32xf32>
    %22 = vector.shape_cast %21 : vector<1x1x32xf32> to vector<1x32xf32>
    %c1_31 = arith.constant 1 : index
    %c0_32 = arith.constant 0 : index
    %c0_33 = arith.constant 0 : index
    %23 = vector.load %arg8[%c1_31, %c0_32, %c0_33] : memref<3x1x32xf32, #tpu.memory_space<vmem>>, vector<1x1x32xf32>
    %24 = vector.shape_cast %23 : vector<1x1x32xf32> to vector<1x32xf32>
    %c1_34 = arith.constant 1 : index
    %c0_35 = arith.constant 0 : index
    %c0_36 = arith.constant 0 : index
    %25 = vector.load %arg9[%c1_34, %c0_35, %c0_36] : memref<3x1x32xf32, #tpu.memory_space<vmem>>, vector<1x1x32xf32>
    %26 = vector.shape_cast %25 : vector<1x1x32xf32> to vector<1x32xf32>
    %c1_37 = arith.constant 1 : index
    %c0_38 = arith.constant 0 : index
    %c0_39 = arith.constant 0 : index
    %27 = vector.load %arg10[%c1_37, %c0_38, %c0_39] : memref<3x32x32xf32, #tpu.memory_space<vmem>>, vector<1x32x32xf32>
    %28 = vector.shape_cast %27 : vector<1x32x32xf32> to vector<32x32xf32>
    %c1_40 = arith.constant 1 : index
    %c0_41 = arith.constant 0 : index
    %c0_42 = arith.constant 0 : index
    %29 = vector.load %arg11[%c1_40, %c0_41, %c0_42] : memref<3x1x32xf32, #tpu.memory_space<vmem>>, vector<1x1x32xf32>
    %30 = vector.shape_cast %29 : vector<1x1x32xf32> to vector<1x32xf32>
    %c1_43 = arith.constant 1 : index
    %c0_44 = arith.constant 0 : index
    %c0_45 = arith.constant 0 : index
    %31 = vector.load %arg12[%c1_43, %c0_44, %c0_45] : memref<3x1x32xf32, #tpu.memory_space<vmem>>, vector<1x1x32xf32>
    %32 = vector.shape_cast %31 : vector<1x1x32xf32> to vector<1x32xf32>
    %c1_46 = arith.constant 1 : index
    %c0_47 = arith.constant 0 : index
    %c0_48 = arith.constant 0 : index
    %33 = vector.load %arg13[%c1_46, %c0_47, %c0_48] : memref<3x1x32xf32, #tpu.memory_space<vmem>>, vector<1x1x32xf32>
    %34 = vector.shape_cast %33 : vector<1x1x32xf32> to vector<1x32xf32>
    %c2 = arith.constant 2 : index
    %c0_49 = arith.constant 0 : index
    %c0_50 = arith.constant 0 : index
    %35 = vector.load %arg6[%c2, %c0_49, %c0_50] : memref<3x5x32xf32, #tpu.memory_space<vmem>>, vector<1x5x32xf32>
    %36 = vector.shape_cast %35 : vector<1x5x32xf32> to vector<5x32xf32>
    %c2_51 = arith.constant 2 : index
    %c0_52 = arith.constant 0 : index
    %c0_53 = arith.constant 0 : index
    %37 = vector.load %arg7[%c2_51, %c0_52, %c0_53] : memref<3x1x32xf32, #tpu.memory_space<vmem>>, vector<1x1x32xf32>
    %38 = vector.shape_cast %37 : vector<1x1x32xf32> to vector<1x32xf32>
    %c2_54 = arith.constant 2 : index
    %c0_55 = arith.constant 0 : index
    %c0_56 = arith.constant 0 : index
    %39 = vector.load %arg8[%c2_54, %c0_55, %c0_56] : memref<3x1x32xf32, #tpu.memory_space<vmem>>, vector<1x1x32xf32>
    %40 = vector.shape_cast %39 : vector<1x1x32xf32> to vector<1x32xf32>
    %c2_57 = arith.constant 2 : index
    %c0_58 = arith.constant 0 : index
    %c0_59 = arith.constant 0 : index
    %41 = vector.load %arg9[%c2_57, %c0_58, %c0_59] : memref<3x1x32xf32, #tpu.memory_space<vmem>>, vector<1x1x32xf32>
    %42 = vector.shape_cast %41 : vector<1x1x32xf32> to vector<1x32xf32>
    %c2_60 = arith.constant 2 : index
    %c0_61 = arith.constant 0 : index
    %c0_62 = arith.constant 0 : index
    %43 = vector.load %arg10[%c2_60, %c0_61, %c0_62] : memref<3x32x32xf32, #tpu.memory_space<vmem>>, vector<1x32x32xf32>
    %44 = vector.shape_cast %43 : vector<1x32x32xf32> to vector<32x32xf32>
    %c2_63 = arith.constant 2 : index
    %c0_64 = arith.constant 0 : index
    %c0_65 = arith.constant 0 : index
    %45 = vector.load %arg11[%c2_63, %c0_64, %c0_65] : memref<3x1x32xf32, #tpu.memory_space<vmem>>, vector<1x1x32xf32>
    %46 = vector.shape_cast %45 : vector<1x1x32xf32> to vector<1x32xf32>
    %c2_66 = arith.constant 2 : index
    %c0_67 = arith.constant 0 : index
    %c0_68 = arith.constant 0 : index
    %47 = vector.load %arg12[%c2_66, %c0_67, %c0_68] : memref<3x1x32xf32, #tpu.memory_space<vmem>>, vector<1x1x32xf32>
    %48 = vector.shape_cast %47 : vector<1x1x32xf32> to vector<1x32xf32>
    %c2_69 = arith.constant 2 : index
    %c0_70 = arith.constant 0 : index
    %c0_71 = arith.constant 0 : index
    %49 = vector.load %arg13[%c2_69, %c0_70, %c0_71] : memref<3x1x32xf32, #tpu.memory_space<vmem>>, vector<1x1x32xf32>
    %50 = vector.shape_cast %49 : vector<1x1x32xf32> to vector<1x32xf32>
    %c0_72 = arith.constant 0 : index
    %c0_73 = arith.constant 0 : index
    %c0_74 = arith.constant 0 : index
    %51 = vector.load %arg1[%c0_72, %c0_73, %c0_74] : memref<1x8x16xf32, #tpu.memory_space<vmem>>, vector<1x8x16xf32>
    %52 = vector.shape_cast %51 : vector<1x8x16xf32> to vector<8x16xf32>
    %c0_75 = arith.constant 0 : index
    %c0_76 = arith.constant 0 : index
    %c0_77 = arith.constant 0 : index
    %53 = vector.load %arg2[%c0_75, %c0_76, %c0_77] : memref<1x8x32xf32, #tpu.memory_space<vmem>>, vector<1x8x32xf32>
    %54 = vector.shape_cast %53 : vector<1x8x32xf32> to vector<8x32xf32>
    %c0_78 = arith.constant 0 : index
    %c0_79 = arith.constant 0 : index
    %c0_80 = arith.constant 0 : index
    %55 = vector.load %arg3[%c0_78, %c0_79, %c0_80] : memref<1x8x1xf32, #tpu.memory_space<vmem>>, vector<1x8x1xf32>
    %56 = vector.shape_cast %55 : vector<1x8x1xf32> to vector<8x1xf32>
    %c0_81 = arith.constant 0 : index
    %c0_82 = arith.constant 0 : index
    %57 = vector.load %arg4[%c0_81, %c0_82] : memref<16x32xf32, #tpu.memory_space<vmem>>, vector<16x32xf32>
    %c0_83 = arith.constant 0 : index
    %c0_84 = arith.constant 0 : index
    %58 = vector.load %arg5[%c0_83, %c0_84] : memref<1x32xf32, #tpu.memory_space<vmem>>, vector<1x32xf32>
    %c0_85 = arith.constant 0 : index
    %c0_86 = arith.constant 0 : index
    %59 = vector.load %arg14[%c0_85, %c0_86] : memref<32x32xf32, #tpu.memory_space<vmem>>, vector<32x32xf32>
    %c0_87 = arith.constant 0 : index
    %c0_88 = arith.constant 0 : index
    %60 = vector.load %arg15[%c0_87, %c0_88] : memref<1x32xf32, #tpu.memory_space<vmem>>, vector<1x32xf32>
    %61 = arith.truncf %52 : vector<8x16xf32> to vector<8x16xbf16>
    %62 = arith.truncf %57 : vector<16x32xf32> to vector<16x32xbf16>
    %cst_89 = arith.constant dense<0.000000e+00> : vector<8x32xf32>
    %63 = tpu.matmul %61, %62, %cst_89 {dimension_numbers = #tpu.dot_dimension_numbers<[1], [0], [0], [1], [0, 0, 1, 1], [], []>} : vector<8x16xbf16>, vector<16x32xbf16>, vector<8x32xf32> -> vector<8x32xf32>
    %64 = vector.broadcast %58 : vector<1x32xf32> to vector<8x32xf32>
    %65 = arith.addf %63, %64 : vector<8x32xf32>
    %66 = arith.addf %65, %54 : vector<8x32xf32>
    %67 = vector.broadcast %56 : vector<8x1xf32> to vector<8x32xf32>
    %68 = arith.mulf %66, %67 : vector<8x32xf32>
    %c5 = arith.constant 5 : index
    %c0_90 = arith.constant 0 : index
    %69 = vector.load %arg17[%c5, %c0_90] : memref<18x32xf32, #tpu.memory_space<vmem>>, vector<8x32xf32>
    tpu.vector_store %arg17[%c5, %c0_90], %68 {strides = array<i32>} : memref<18x32xf32, #tpu.memory_space<vmem>>, vector<8x32xf32>,
    %cst_91 = arith.constant 0.000000e+00 : f32
    %70 = vector.broadcast %cst_91 : f32 to vector<8x32xf32>
    %71 = vector.broadcast %6 : vector<1x32xf32> to vector<8x32xf32>
    %72 = arith.addf %70, %71 : vector<8x32xf32>
    %c3 = arith.constant 3 : index
    %c0_92 = arith.constant 0 : index
    %73 = vector.load %arg17[%c3, %c0_92] : memref<18x32xf32, #tpu.memory_space<vmem>>, vector<8x32xf32>
    %74 = vector.extract_strided_slice %4 {offsets = [0, 0], sizes = [1, 32], strides = [1, 1]} : vector<5x32xf32> to vector<1x32xf32>
    %75 = vector.broadcast %74 : vector<1x32xf32> to vector<8x32xf32>
    %76 = arith.mulf %73, %75 : vector<8x32xf32>
    %77 = arith.addf %72, %76 : vector<8x32xf32>
    %c4 = arith.constant 4 : index
    %c0_93 = arith.constant 0 : index
    %78 = vector.load %arg17[%c4, %c0_93] : memref<18x32xf32, #tpu.memory_space<vmem>>, vector<8x32xf32>
    %79 = vector.extract_strided_slice %4 {offsets = [1, 0], sizes = [1, 32], strides = [1, 1]} : vector<5x32xf32> to vector<1x32xf32>
    %80 = vector.broadcast %79 : vector<1x32xf32> to vector<8x32xf32>
    %81 = arith.mulf %78, %80 : vector<8x32xf32>
    %82 = arith.addf %77, %81 : vector<8x32xf32>
    %c5_94 = arith.constant 5 : index
    %c0_95 = arith.constant 0 : index
    %83 = vector.load %arg17[%c5_94, %c0_95] : memref<18x32xf32, #tpu.memory_space<vmem>>, vector<8x32xf32>
    %84 = vector.extract_strided_slice %4 {offsets = [2, 0], sizes = [1, 32], strides = [1, 1]} : vector<5x32xf32> to vector<1x32xf32>
    %85 = vector.broadcast %84 : vector<1x32xf32> to vector<8x32xf32>
    %86 = arith.mulf %83, %85 : vector<8x32xf32>
    %87 = arith.addf %82, %86 : vector<8x32xf32>
    %c6 = arith.constant 6 : index
    %c0_96 = arith.constant 0 : index
    %88 = vector.load %arg17[%c6, %c0_96] : memref<18x32xf32, #tpu.memory_space<vmem>>, vector<8x32xf32>
    %89 = vector.extract_strided_slice %4 {offsets = [3, 0], sizes = [1, 32], strides = [1, 1]} : vector<5x32xf32> to vector<1x32xf32>
    %90 = vector.broadcast %89 : vector<1x32xf32> to vector<8x32xf32>
    %91 = arith.mulf %88, %90 : vector<8x32xf32>
    %92 = arith.addf %87, %91 : vector<8x32xf32>
    %c7 = arith.constant 7 : index
    %c0_97 = arith.constant 0 : index
    %93 = vector.load %arg17[%c7, %c0_97] : memref<18x32xf32, #tpu.memory_space<vmem>>, vector<8x32xf32>
    %94 = vector.extract_strided_slice %4 {offsets = [4, 0], sizes = [1, 32], strides = [1, 1]} : vector<5x32xf32> to vector<1x32xf32>
    %95 = vector.broadcast %94 : vector<1x32xf32> to vector<8x32xf32>
    %96 = arith.mulf %93, %95 : vector<8x32xf32>
    %97 = arith.addf %92, %96 : vector<8x32xf32>
    %cst_98 = arith.constant dense<0.000000e+00> : vector<8xf32>
    %98 = vector.multi_reduction <add>, %97, %cst_98 [1] : vector<8x32xf32> to vector<8xf32>
    %99 = vector.shape_cast %98 : vector<8xf32> to vector<8x1xf32>
    %cst_99 = arith.constant 3.200000e+01 : f32
    %100 = vector.broadcast %cst_99 : f32 to vector<8x1xf32>
    %101 = arith.divf %99, %100 : vector<8x1xf32>
    %102 = vector.broadcast %101 : vector<8x1xf32> to vector<8x32xf32>
    %103 = arith.subf %97, %102 : vector<8x32xf32>
    %104 = arith.mulf %103, %103 : vector<8x32xf32>
    %cst_100 = arith.constant dense<0.000000e+00> : vector<8xf32>
    %105 = vector.multi_reduction <add>, %104, %cst_100 [1] : vector<8x32xf32> to vector<8xf32>
    %106 = vector.shape_cast %105 : vector<8xf32> to vector<8x1xf32>
    %cst_101 = arith.constant 3.200000e+01 : f32
    %107 = vector.broadcast %cst_101 : f32 to vector<8x1xf32>
    %108 = arith.divf %106, %107 : vector<8x1xf32>
    %109 = vector.broadcast %101 : vector<8x1xf32> to vector<8x32xf32>
    %110 = arith.subf %97, %109 : vector<8x32xf32>
    %cst_102 = arith.constant 9.99999974E-6 : f32
    %111 = vector.broadcast %cst_102 : f32 to vector<8x1xf32>
    %112 = arith.addf %108, %111 : vector<8x1xf32>
    %113 = math.rsqrt %112 : vector<8x1xf32>
    %114 = vector.broadcast %113 : vector<8x1xf32> to vector<8x32xf32>
    %115 = arith.mulf %110, %114 : vector<8x32xf32>
    %116 = vector.broadcast %8 : vector<1x32xf32> to vector<8x32xf32>
    %117 = arith.mulf %115, %116 : vector<8x32xf32>
    %118 = vector.broadcast %10 : vector<1x32xf32> to vector<8x32xf32>
    %119 = arith.addf %117, %118 : vector<8x32xf32>
    %cst_103 = arith.constant 5.000000e-01 : f32
    %120 = vector.broadcast %cst_103 : f32 to vector<8x32xf32>
    %121 = arith.mulf %120, %119 : vector<8x32xf32>
    %cst_104 = arith.constant 4.471500e-02 : f32
    %122 = vector.broadcast %cst_104 : f32 to vector<8x32xf32>
    %123 = arith.mulf %122, %119 : vector<8x32xf32>
    %124 = arith.mulf %123, %119 : vector<8x32xf32>
    %125 = arith.mulf %124, %119 : vector<8x32xf32>
    %126 = arith.addf %119, %125 : vector<8x32xf32>
    %cst_105 = arith.constant 0.797884583 : f32
    %127 = vector.broadcast %cst_105 : f32 to vector<8x32xf32>
    %128 = arith.mulf %127, %126 : vector<8x32xf32>
    %129 = math.tanh %128 : vector<8x32xf32>
    %cst_106 = arith.constant 1.000000e+00 : f32
    %130 = vector.broadcast %cst_106 : f32 to vector<8x32xf32>
    %131 = arith.addf %130, %129 : vector<8x32xf32>
    %132 = arith.mulf %121, %131 : vector<8x32xf32>
    %133 = arith.truncf %132 : vector<8x32xf32> to vector<8x32xbf16>
    %134 = arith.truncf %12 : vector<32x32xf32> to vector<32x32xbf16>
    %cst_107 = arith.constant dense<0.000000e+00> : vector<8x32xf32>
    %135 = tpu.matmul %133, %134, %cst_107 {dimension_numbers = #tpu.dot_dimension_numbers<[1], [0], [0], [1], [0, 0, 1, 1], [], []>} : vector<8x32xbf16>, vector<32x32xbf16>, vector<8x32xf32> -> vector<8x32xf32>
    %136 = vector.broadcast %14 : vector<1x32xf32> to vector<8x32xf32>
    %137 = arith.addf %135, %136 : vector<8x32xf32>
    %cst_108 = arith.constant dense<0.000000e+00> : vector<8xf32>
    %138 = vector.multi_reduction <add>, %137, %cst_108 [1] : vector<8x32xf32> to vector<8xf32>
    %139 = vector.shape_cast %138 : vector<8xf32> to vector<8x1xf32>
    %cst_109 = arith.constant 3.200000e+01 : f32
    %140 = vector.broadcast %cst_109 : f32 to vector<8x1xf32>
    %141 = arith.divf %139, %140 : vector<8x1xf32>
    %142 = vector.broadcast %141 : vector<8x1xf32> to vector<8x32xf32>
    %143 = arith.subf %137, %142 : vector<8x32xf32>
    %144 = arith.mulf %143, %143 : vector<8x32xf32>
    %cst_110 = arith.constant dense<0.000000e+00> : vector<8xf32>
    %145 = vector.multi_reduction <add>, %144, %cst_110 [1] : vector<8x32xf32> to vector<8xf32>
    %146 = vector.shape_cast %145 : vector<8xf32> to vector<8x1xf32>
    %cst_111 = arith.constant 3.200000e+01 : f32
    %147 = vector.broadcast %cst_111 : f32 to vector<8x1xf32>
    %148 = arith.divf %146, %147 : vector<8x1xf32>
    %149 = vector.broadcast %141 : vector<8x1xf32> to vector<8x32xf32>
    %150 = arith.subf %137, %149 : vector<8x32xf32>
    %cst_112 = arith.constant 9.99999974E-6 : f32
    %151 = vector.broadcast %cst_112 : f32 to vector<8x1xf32>
    %152 = arith.addf %148, %151 : vector<8x1xf32>
    %153 = math.rsqrt %152 : vector<8x1xf32>
    %154 = vector.broadcast %153 : vector<8x1xf32> to vector<8x32xf32>
    %155 = arith.mulf %150, %154 : vector<8x32xf32>
    %156 = vector.broadcast %16 : vector<1x32xf32> to vector<8x32xf32>
    %157 = arith.mulf %155, %156 : vector<8x32xf32>
    %158 = vector.broadcast %18 : vector<1x32xf32> to vector<8x32xf32>
    %159 = arith.addf %157, %158 : vector<8x32xf32>
    %cst_113 = arith.constant 5.000000e-01 : f32
    %160 = vector.broadcast %cst_113 : f32 to vector<8x32xf32>
    %161 = arith.mulf %160, %159 : vector<8x32xf32>
    %cst_114 = arith.constant 4.471500e-02 : f32
    %162 = vector.broadcast %cst_114 : f32 to vector<8x32xf32>
    %163 = arith.mulf %162, %159 : vector<8x32xf32>
    %164 = arith.mulf %163, %159 : vector<8x32xf32>
    %165 = arith.mulf %164, %159 : vector<8x32xf32>
    %166 = arith.addf %159, %165 : vector<8x32xf32>
    %cst_115 = arith.constant 0.797884583 : f32
    %167 = vector.broadcast %cst_115 : f32 to vector<8x32xf32>
    %168 = arith.mulf %167, %166 : vector<8x32xf32>
    %169 = math.tanh %168 : vector<8x32xf32>
    %cst_116 = arith.constant 1.000000e+00 : f32
    %170 = vector.broadcast %cst_116 : f32 to vector<8x32xf32>
    %171 = arith.addf %170, %169 : vector<8x32xf32>
    %172 = arith.mulf %161, %171 : vector<8x32xf32>
    %173 = arith.addf %66, %172 : vector<8x32xf32>
    %174 = vector.broadcast %56 : vector<8x1xf32> to vector<8x32xf32>
    %175 = arith.mulf %173, %174 : vector<8x32xf32>
    %c5_117 = arith.constant 5 : index
    %c0_118 = arith.constant 0 : index
    %176 = vector.load %arg17[%c5_117, %c0_118] : memref<18x32xf32, #tpu.memory_space<vmem>>, vector<8x32xf32>
    tpu.vector_store %arg17[%c5_117, %c0_118], %175 {strides = array<i32>} : memref<18x32xf32, #tpu.memory_space<vmem>>, vector<8x32xf32>,
    %cst_119 = arith.constant 0.000000e+00 : f32
    %177 = vector.broadcast %cst_119 : f32 to vector<8x32xf32>
    %178 = vector.broadcast %22 : vector<1x32xf32> to vector<8x32xf32>
    %179 = arith.addf %177, %178 : vector<8x32xf32>
    %c0_120 = arith.constant 0 : index
    %c0_121 = arith.constant 0 : index
    %180 = vector.load %arg17[%c0_120, %c0_121] : memref<18x32xf32, #tpu.memory_space<vmem>>, vector<8x32xf32>
    %181 = vector.extract_strided_slice %20 {offsets = [1, 0], sizes = [1, 32], strides = [1, 1]} : vector<5x32xf32> to vector<1x32xf32>
    %182 = vector.broadcast %181 : vector<1x32xf32> to vector<8x32xf32>
    %183 = arith.mulf %180, %182 : vector<8x32xf32>
    %184 = arith.addf %179, %183 : vector<8x32xf32>
    %c5_122 = arith.constant 5 : index
    %c0_123 = arith.constant 0 : index
    %185 = vector.load %arg17[%c5_122, %c0_123] : memref<18x32xf32, #tpu.memory_space<vmem>>, vector<8x32xf32>
    %186 = vector.extract_strided_slice %20 {offsets = [2, 0], sizes = [1, 32], strides = [1, 1]} : vector<5x32xf32> to vector<1x32xf32>
    %187 = vector.broadcast %186 : vector<1x32xf32> to vector<8x32xf32>
    %188 = arith.mulf %185, %187 : vector<8x32xf32>
    %189 = arith.addf %184, %188 : vector<8x32xf32>
    %c10 = arith.constant 10 : index
    %c0_124 = arith.constant 0 : index
    %190 = vector.load %arg17[%c10, %c0_124] : memref<18x32xf32, #tpu.memory_space<vmem>>, vector<8x32xf32>
    %191 = vector.extract_strided_slice %20 {offsets = [3, 0], sizes = [1, 32], strides = [1, 1]} : vector<5x32xf32> to vector<1x32xf32>
    %192 = vector.broadcast %191 : vector<1x32xf32> to vector<8x32xf32>
    %193 = arith.mulf %190, %192 : vector<8x32xf32>
    %194 = arith.addf %189, %193 : vector<8x32xf32>
    %cst_125 = arith.constant dense<0.000000e+00> : vector<8xf32>
    %195 = vector.multi_reduction <add>, %194, %cst_125 [1] : vector<8x32xf32> to vector<8xf32>
    %196 = vector.shape_cast %195 : vector<8xf32> to vector<8x1xf32>
    %cst_126 = arith.constant 3.200000e+01 : f32
    %197 = vector.broadcast %cst_126 : f32 to vector<8x1xf32>
    %198 = arith.divf %196, %197 : vector<8x1xf32>
    %199 = vector.broadcast %198 : vector<8x1xf32> to vector<8x32xf32>
    %200 = arith.subf %194, %199 : vector<8x32xf32>
    %201 = arith.mulf %200, %200 : vector<8x32xf32>
    %cst_127 = arith.constant dense<0.000000e+00> : vector<8xf32>
    %202 = vector.multi_reduction <add>, %201, %cst_127 [1] : vector<8x32xf32> to vector<8xf32>
    %203 = vector.shape_cast %202 : vector<8xf32> to vector<8x1xf32>
    %cst_128 = arith.constant 3.200000e+01 : f32
    %204 = vector.broadcast %cst_128 : f32 to vector<8x1xf32>
    %205 = arith.divf %203, %204 : vector<8x1xf32>
    %206 = vector.broadcast %198 : vector<8x1xf32> to vector<8x32xf32>
    %207 = arith.subf %194, %206 : vector<8x32xf32>
    %cst_129 = arith.constant 9.99999974E-6 : f32
    %208 = vector.broadcast %cst_129 : f32 to vector<8x1xf32>
    %209 = arith.addf %205, %208 : vector<8x1xf32>
    %210 = math.rsqrt %209 : vector<8x1xf32>
    %211 = vector.broadcast %210 : vector<8x1xf32> to vector<8x32xf32>
    %212 = arith.mulf %207, %211 : vector<8x32xf32>
    %213 = vector.broadcast %24 : vector<1x32xf32> to vector<8x32xf32>
    %214 = arith.mulf %212, %213 : vector<8x32xf32>
    %215 = vector.broadcast %26 : vector<1x32xf32> to vector<8x32xf32>
    %216 = arith.addf %214, %215 : vector<8x32xf32>
    %cst_130 = arith.constant 5.000000e-01 : f32
    %217 = vector.broadcast %cst_130 : f32 to vector<8x32xf32>
    %218 = arith.mulf %217, %216 : vector<8x32xf32>
    %cst_131 = arith.constant 4.471500e-02 : f32
    %219 = vector.broadcast %cst_131 : f32 to vector<8x32xf32>
    %220 = arith.mulf %219, %216 : vector<8x32xf32>
    %221 = arith.mulf %220, %216 : vector<8x32xf32>
    %222 = arith.mulf %221, %216 : vector<8x32xf32>
    %223 = arith.addf %216, %222 : vector<8x32xf32>
    %cst_132 = arith.constant 0.797884583 : f32
    %224 = vector.broadcast %cst_132 : f32 to vector<8x32xf32>
    %225 = arith.mulf %224, %223 : vector<8x32xf32>
    %226 = math.tanh %225 : vector<8x32xf32>
    %cst_133 = arith.constant 1.000000e+00 : f32
    %227 = vector.broadcast %cst_133 : f32 to vector<8x32xf32>
    %228 = arith.addf %227, %226 : vector<8x32xf32>
    %229 = arith.mulf %218, %228 : vector<8x32xf32>
    %230 = arith.truncf %229 : vector<8x32xf32> to vector<8x32xbf16>
    %231 = arith.truncf %28 : vector<32x32xf32> to vector<32x32xbf16>
    %cst_134 = arith.constant dense<0.000000e+00> : vector<8x32xf32>
    %232 = tpu.matmul %230, %231, %cst_134 {dimension_numbers = #tpu.dot_dimension_numbers<[1], [0], [0], [1], [0, 0, 1, 1], [], []>} : vector<8x32xbf16>, vector<32x32xbf16>, vector<8x32xf32> -> vector<8x32xf32>
    %233 = vector.broadcast %30 : vector<1x32xf32> to vector<8x32xf32>
    %234 = arith.addf %232, %233 : vector<8x32xf32>
    %cst_135 = arith.constant dense<0.000000e+00> : vector<8xf32>
    %235 = vector.multi_reduction <add>, %234, %cst_135 [1] : vector<8x32xf32> to vector<8xf32>
    %236 = vector.shape_cast %235 : vector<8xf32> to vector<8x1xf32>
    %cst_136 = arith.constant 3.200000e+01 : f32
    %237 = vector.broadcast %cst_136 : f32 to vector<8x1xf32>
    %238 = arith.divf %236, %237 : vector<8x1xf32>
    %239 = vector.broadcast %238 : vector<8x1xf32> to vector<8x32xf32>
    %240 = arith.subf %234, %239 : vector<8x32xf32>
    %241 = arith.mulf %240, %240 : vector<8x32xf32>
    %cst_137 = arith.constant dense<0.000000e+00> : vector<8xf32>
    %242 = vector.multi_reduction <add>, %241, %cst_137 [1] : vector<8x32xf32> to vector<8xf32>
    %243 = vector.shape_cast %242 : vector<8xf32> to vector<8x1xf32>
    %cst_138 = arith.constant 3.200000e+01 : f32
    %244 = vector.broadcast %cst_138 : f32 to vector<8x1xf32>
    %245 = arith.divf %243, %244 : vector<8x1xf32>
    %246 = vector.broadcast %238 : vector<8x1xf32> to vector<8x32xf32>
    %247 = arith.subf %234, %246 : vector<8x32xf32>
    %cst_139 = arith.constant 9.99999974E-6 : f32
    %248 = vector.broadcast %cst_139 : f32 to vector<8x1xf32>
    %249 = arith.addf %245, %248 : vector<8x1xf32>
    %250 = math.rsqrt %249 : vector<8x1xf32>
    %251 = vector.broadcast %250 : vector<8x1xf32> to vector<8x32xf32>
    %252 = arith.mulf %247, %251 : vector<8x32xf32>
    %253 = vector.broadcast %32 : vector<1x32xf32> to vector<8x32xf32>
    %254 = arith.mulf %252, %253 : vector<8x32xf32>
    %255 = vector.broadcast %34 : vector<1x32xf32> to vector<8x32xf32>
    %256 = arith.addf %254, %255 : vector<8x32xf32>
    %cst_140 = arith.constant 5.000000e-01 : f32
    %257 = vector.broadcast %cst_140 : f32 to vector<8x32xf32>
    %258 = arith.mulf %257, %256 : vector<8x32xf32>
    %cst_141 = arith.constant 4.471500e-02 : f32
    %259 = vector.broadcast %cst_141 : f32 to vector<8x32xf32>
    %260 = arith.mulf %259, %256 : vector<8x32xf32>
    %261 = arith.mulf %260, %256 : vector<8x32xf32>
    %262 = arith.mulf %261, %256 : vector<8x32xf32>
    %263 = arith.addf %256, %262 : vector<8x32xf32>
    %cst_142 = arith.constant 0.797884583 : f32
    %264 = vector.broadcast %cst_142 : f32 to vector<8x32xf32>
    %265 = arith.mulf %264, %263 : vector<8x32xf32>
    %266 = math.tanh %265 : vector<8x32xf32>
    %cst_143 = arith.constant 1.000000e+00 : f32
    %267 = vector.broadcast %cst_143 : f32 to vector<8x32xf32>
    %268 = arith.addf %267, %266 : vector<8x32xf32>
    %269 = arith.mulf %258, %268 : vector<8x32xf32>
    %270 = arith.addf %173, %269 : vector<8x32xf32>
    %271 = vector.broadcast %56 : vector<8x1xf32> to vector<8x32xf32>
    %272 = arith.mulf %270, %271 : vector<8x32xf32>
    %c5_144 = arith.constant 5 : index
    %c0_145 = arith.constant 0 : index
    %273 = vector.load %arg17[%c5_144, %c0_145] : memref<18x32xf32, #tpu.memory_space<vmem>>, vector<8x32xf32>
    tpu.vector_store %arg17[%c5_144, %c0_145], %272 {strides = array<i32>} : memref<18x32xf32, #tpu.memory_space<vmem>>, vector<8x32xf32>,
    %cst_146 = arith.constant 0.000000e+00 : f32
    %274 = vector.broadcast %cst_146 : f32 to vector<8x32xf32>
    %275 = vector.broadcast %38 : vector<1x32xf32> to vector<8x32xf32>
    %276 = arith.addf %274, %275 : vector<8x32xf32>
    %c5_147 = arith.constant 5 : index
    %c0_148 = arith.constant 0 : index
    %277 = vector.load %arg17[%c5_147, %c0_148] : memref<18x32xf32, #tpu.memory_space<vmem>>, vector<8x32xf32>
    %278 = vector.extract_strided_slice %36 {offsets = [2, 0], sizes = [1, 32], strides = [1, 1]} : vector<5x32xf32> to vector<1x32xf32>
    %279 = vector.broadcast %278 : vector<1x32xf32> to vector<8x32xf32>
    %280 = arith.mulf %277, %279 : vector<8x32xf32>
    %281 = arith.addf %276, %280 : vector<8x32xf32>
    %cst_149 = arith.constant dense<0.000000e+00> : vector<8xf32>
    %282 = vector.multi_reduction <add>, %281, %cst_149 [1] : vector<8x32xf32> to vector<8xf32>
    %283 = vector.shape_cast %282 : vector<8xf32> to vector<8x1xf32>
    %cst_150 = arith.constant 3.200000e+01 : f32
    %284 = vector.broadcast %cst_150 : f32 to vector<8x1xf32>
    %285 = arith.divf %283, %284 : vector<8x1xf32>
    %286 = vector.broadcast %285 : vector<8x1xf32> to vector<8x32xf32>
    %287 = arith.subf %281, %286 : vector<8x32xf32>
    %288 = arith.mulf %287, %287 : vector<8x32xf32>
    %cst_151 = arith.constant dense<0.000000e+00> : vector<8xf32>
    %289 = vector.multi_reduction <add>, %288, %cst_151 [1] : vector<8x32xf32> to vector<8xf32>
    %290 = vector.shape_cast %289 : vector<8xf32> to vector<8x1xf32>
    %cst_152 = arith.constant 3.200000e+01 : f32
    %291 = vector.broadcast %cst_152 : f32 to vector<8x1xf32>
    %292 = arith.divf %290, %291 : vector<8x1xf32>
    %293 = vector.broadcast %285 : vector<8x1xf32> to vector<8x32xf32>
    %294 = arith.subf %281, %293 : vector<8x32xf32>
    %cst_153 = arith.constant 9.99999974E-6 : f32
    %295 = vector.broadcast %cst_153 : f32 to vector<8x1xf32>
    %296 = arith.addf %292, %295 : vector<8x1xf32>
    %297 = math.rsqrt %296 : vector<8x1xf32>
    %298 = vector.broadcast %297 : vector<8x1xf32> to vector<8x32xf32>
    %299 = arith.mulf %294, %298 : vector<8x32xf32>
    %300 = vector.broadcast %40 : vector<1x32xf32> to vector<8x32xf32>
    %301 = arith.mulf %299, %300 : vector<8x32xf32>
    %302 = vector.broadcast %42 : vector<1x32xf32> to vector<8x32xf32>
    %303 = arith.addf %301, %302 : vector<8x32xf32>
    %cst_154 = arith.constant 5.000000e-01 : f32
    %304 = vector.broadcast %cst_154 : f32 to vector<8x32xf32>
    %305 = arith.mulf %304, %303 : vector<8x32xf32>
    %cst_155 = arith.constant 4.471500e-02 : f32
    %306 = vector.broadcast %cst_155 : f32 to vector<8x32xf32>
    %307 = arith.mulf %306, %303 : vector<8x32xf32>
    %308 = arith.mulf %307, %303 : vector<8x32xf32>
    %309 = arith.mulf %308, %303 : vector<8x32xf32>
    %310 = arith.addf %303, %309 : vector<8x32xf32>
    %cst_156 = arith.constant 0.797884583 : f32
    %311 = vector.broadcast %cst_156 : f32 to vector<8x32xf32>
    %312 = arith.mulf %311, %310 : vector<8x32xf32>
    %313 = math.tanh %312 : vector<8x32xf32>
    %cst_157 = arith.constant 1.000000e+00 : f32
    %314 = vector.broadcast %cst_157 : f32 to vector<8x32xf32>
    %315 = arith.addf %314, %313 : vector<8x32xf32>
    %316 = arith.mulf %305, %315 : vector<8x32xf32>
    %317 = arith.truncf %316 : vector<8x32xf32> to vector<8x32xbf16>
    %318 = arith.truncf %44 : vector<32x32xf32> to vector<32x32xbf16>
    %cst_158 = arith.constant dense<0.000000e+00> : vector<8x32xf32>
    %319 = tpu.matmul %317, %318, %cst_158 {dimension_numbers = #tpu.dot_dimension_numbers<[1], [0], [0], [1], [0, 0, 1, 1], [], []>} : vector<8x32xbf16>, vector<32x32xbf16>, vector<8x32xf32> -> vector<8x32xf32>
    %320 = vector.broadcast %46 : vector<1x32xf32> to vector<8x32xf32>
    %321 = arith.addf %319, %320 : vector<8x32xf32>
    %cst_159 = arith.constant dense<0.000000e+00> : vector<8xf32>
    %322 = vector.multi_reduction <add>, %321, %cst_159 [1] : vector<8x32xf32> to vector<8xf32>
    %323 = vector.shape_cast %322 : vector<8xf32> to vector<8x1xf32>
    %cst_160 = arith.constant 3.200000e+01 : f32
    %324 = vector.broadcast %cst_160 : f32 to vector<8x1xf32>
    %325 = arith.divf %323, %324 : vector<8x1xf32>
    %326 = vector.broadcast %325 : vector<8x1xf32> to vector<8x32xf32>
    %327 = arith.subf %321, %326 : vector<8x32xf32>
    %328 = arith.mulf %327, %327 : vector<8x32xf32>
    %cst_161 = arith.constant dense<0.000000e+00> : vector<8xf32>
    %329 = vector.multi_reduction <add>, %328, %cst_161 [1] : vector<8x32xf32> to vector<8xf32>
    %330 = vector.shape_cast %329 : vector<8xf32> to vector<8x1xf32>
    %cst_162 = arith.constant 3.200000e+01 : f32
    %331 = vector.broadcast %cst_162 : f32 to vector<8x1xf32>
    %332 = arith.divf %330, %331 : vector<8x1xf32>
    %333 = vector.broadcast %325 : vector<8x1xf32> to vector<8x32xf32>
    %334 = arith.subf %321, %333 : vector<8x32xf32>
    %cst_163 = arith.constant 9.99999974E-6 : f32
    %335 = vector.broadcast %cst_163 : f32 to vector<8x1xf32>
    %336 = arith.addf %332, %335 : vector<8x1xf32>
    %337 = math.rsqrt %336 : vector<8x1xf32>
    %338 = vector.broadcast %337 : vector<8x1xf32> to vector<8x32xf32>
    %339 = arith.mulf %334, %338 : vector<8x32xf32>
    %340 = vector.broadcast %48 : vector<1x32xf32> to vector<8x32xf32>
    %341 = arith.mulf %339, %340 : vector<8x32xf32>
    %342 = vector.broadcast %50 : vector<1x32xf32> to vector<8x32xf32>
    %343 = arith.addf %341, %342 : vector<8x32xf32>
    %cst_164 = arith.constant 5.000000e-01 : f32
    %344 = vector.broadcast %cst_164 : f32 to vector<8x32xf32>
    %345 = arith.mulf %344, %343 : vector<8x32xf32>
    %cst_165 = arith.constant 4.471500e-02 : f32
    %346 = vector.broadcast %cst_165 : f32 to vector<8x32xf32>
    %347 = arith.mulf %346, %343 : vector<8x32xf32>
    %348 = arith.mulf %347, %343 : vector<8x32xf32>
    %349 = arith.mulf %348, %343 : vector<8x32xf32>
    %350 = arith.addf %343, %349 : vector<8x32xf32>
    %cst_166 = arith.constant 0.797884583 : f32
    %351 = vector.broadcast %cst_166 : f32 to vector<8x32xf32>
    %352 = arith.mulf %351, %350 : vector<8x32xf32>
    %353 = math.tanh %352 : vector<8x32xf32>
    %cst_167 = arith.constant 1.000000e+00 : f32
    %354 = vector.broadcast %cst_167 : f32 to vector<8x32xf32>
    %355 = arith.addf %354, %353 : vector<8x32xf32>
    %356 = arith.mulf %345, %355 : vector<8x32xf32>
    %357 = arith.addf %270, %356 : vector<8x32xf32>
    %358 = vector.broadcast %56 : vector<8x1xf32> to vector<8x32xf32>
    %359 = arith.mulf %357, %358 : vector<8x32xf32>
    %360 = arith.truncf %359 : vector<8x32xf32> to vector<8x32xbf16>
    %361 = arith.truncf %59 : vector<32x32xf32> to vector<32x32xbf16>
    %cst_168 = arith.constant dense<0.000000e+00> : vector<8x32xf32>
    %362 = tpu.matmul %360, %361, %cst_168 {dimension_numbers = #tpu.dot_dimension_numbers<[1], [0], [0], [1], [0, 0, 1, 1], [], []>} : vector<8x32xbf16>, vector<32x32xbf16>, vector<8x32xf32> -> vector<8x32xf32>
    %363 = vector.broadcast %60 : vector<1x32xf32> to vector<8x32xf32>
    %364 = arith.addf %362, %363 : vector<8x32xf32>
    %365 = vector.broadcast %56 : vector<8x1xf32> to vector<8x32xf32>
    %366 = arith.mulf %364, %365 : vector<8x32xf32>
    %c0_169 = arith.constant 0 : index
    %c0_170 = arith.constant 0 : index
    %c0_171 = arith.constant 0 : index
    %367 = vector.load %arg16[%c0_169, %c0_170, %c0_171] : memref<1x8x32xf32, #tpu.memory_space<vmem>>, vector<1x8x32xf32>
    %368 = vector.shape_cast %367 : vector<1x8x32xf32> to vector<8x32xf32>
    %369 = vector.shape_cast %366 : vector<8x32xf32> to vector<1x8x32xf32>
    tpu.vector_store %arg16[%c0_169, %c0_170, %c0_171], %369 {strides = array<i32>} : memref<1x8x32xf32, #tpu.memory_space<vmem>>, vector<1x8x32xf32>,
    return
  }
  func.func @transform_0(%arg0: i32) -> (i32, i32, i32) {
    %c0_i32 = arith.constant 0 : i32
    %c0_i32_0 = arith.constant 0 : i32
    %c0_i32_1 = arith.constant 0 : i32
    return %arg0, %c0_i32, %c0_i32_0 : i32, i32, i32
  }
  func.func @transform_1(%arg0: i32) -> (i32, i32, i32) {
    %c0_i32 = arith.constant 0 : i32
    %c0_i32_0 = arith.constant 0 : i32
    %c0_i32_1 = arith.constant 0 : i32
    return %arg0, %c0_i32, %c0_i32_0 : i32, i32, i32
  }
  func.func @transform_2(%arg0: i32) -> (i32, i32, i32) {
    %c0_i32 = arith.constant 0 : i32
    %c0_i32_0 = arith.constant 0 : i32
    %c0_i32_1 = arith.constant 0 : i32
    return %arg0, %c0_i32, %c0_i32_0 : i32, i32, i32
  }
  func.func @transform_3(%arg0: i32) -> (i32, i32) {
    %c0_i32 = arith.constant 0 : i32
    %c0_i32_0 = arith.constant 0 : i32
    %c0_i32_1 = arith.constant 0 : i32
    return %c0_i32, %c0_i32_0 : i32, i32
  }
  func.func @transform_4(%arg0: i32) -> (i32, i32) {
    %c0_i32 = arith.constant 0 : i32
    %c0_i32_0 = arith.constant 0 : i32
    %c0_i32_1 = arith.constant 0 : i32
    return %c0_i32, %c0_i32_0 : i32, i32
  }
  func.func @transform_5(%arg0: i32) -> (i32, i32, i32) {
    %c0_i32 = arith.constant 0 : i32
    %c0_i32_0 = arith.constant 0 : i32
    %c0_i32_1 = arith.constant 0 : i32
    %c0_i32_2 = arith.constant 0 : i32
    return %c0_i32, %c0_i32_0, %c0_i32_1 : i32, i32, i32
  }
  func.func @transform_6(%arg0: i32) -> (i32, i32, i32) {
    %c0_i32 = arith.constant 0 : i32
    %c0_i32_0 = arith.constant 0 : i32
    %c0_i32_1 = arith.constant 0 : i32
    %c0_i32_2 = arith.constant 0 : i32
    return %c0_i32, %c0_i32_0, %c0_i32_1 : i32, i32, i32
  }
  func.func @transform_7(%arg0: i32) -> (i32, i32, i32) {
    %c0_i32 = arith.constant 0 : i32
    %c0_i32_0 = arith.constant 0 : i32
    %c0_i32_1 = arith.constant 0 : i32
    %c0_i32_2 = arith.constant 0 : i32
    return %c0_i32, %c0_i32_0, %c0_i32_1 : i32, i32, i32
  }
  func.func @transform_8(%arg0: i32) -> (i32, i32, i32) {
    %c0_i32 = arith.constant 0 : i32
    %c0_i32_0 = arith.constant 0 : i32
    %c0_i32_1 = arith.constant 0 : i32
    %c0_i32_2 = arith.constant 0 : i32
    return %c0_i32, %c0_i32_0, %c0_i32_1 : i32, i32, i32
  }
  func.func @transform_9(%arg0: i32) -> (i32, i32, i32) {
    %c0_i32 = arith.constant 0 : i32
    %c0_i32_0 = arith.constant 0 : i32
    %c0_i32_1 = arith.constant 0 : i32
    %c0_i32_2 = arith.constant 0 : i32
    return %c0_i32, %c0_i32_0, %c0_i32_1 : i32, i32, i32
  }
  func.func @transform_10(%arg0: i32) -> (i32, i32, i32) {
    %c0_i32 = arith.constant 0 : i32
    %c0_i32_0 = arith.constant 0 : i32
    %c0_i32_1 = arith.constant 0 : i32
    %c0_i32_2 = arith.constant 0 : i32
    return %c0_i32, %c0_i32_0, %c0_i32_1 : i32, i32, i32
  }
  func.func @transform_11(%arg0: i32) -> (i32, i32, i32) {
    %c0_i32 = arith.constant 0 : i32
    %c0_i32_0 = arith.constant 0 : i32
    %c0_i32_1 = arith.constant 0 : i32
    %c0_i32_2 = arith.constant 0 : i32
    return %c0_i32, %c0_i32_0, %c0_i32_1 : i32, i32, i32
  }
  func.func @transform_12(%arg0: i32) -> (i32, i32, i32) {
    %c0_i32 = arith.constant 0 : i32
    %c0_i32_0 = arith.constant 0 : i32
    %c0_i32_1 = arith.constant 0 : i32
    %c0_i32_2 = arith.constant 0 : i32
    return %c0_i32, %c0_i32_0, %c0_i32_1 : i32, i32, i32
  }
  func.func @transform_13(%arg0: i32) -> (i32, i32) {
    %c0_i32 = arith.constant 0 : i32
    %c0_i32_0 = arith.constant 0 : i32
    %c0_i32_1 = arith.constant 0 : i32
    return %c0_i32, %c0_i32_0 : i32, i32
  }
  func.func @transform_14(%arg0: i32) -> (i32, i32) {
    %c0_i32 = arith.constant 0 : i32
    %c0_i32_0 = arith.constant 0 : i32
    %c0_i32_1 = arith.constant 0 : i32
    return %c0_i32, %c0_i32_0 : i32, i32
  }
  func.func @transform_15(%arg0: i32) -> (i32, i32, i32) {
    %c0_i32 = arith.constant 0 : i32
    %c0_i32_0 = arith.constant 0 : i32
    %c0_i32_1 = arith.constant 0 : i32
    return %arg0, %c0_i32, %c0_i32_0 : i32, i32, i32
  }
}

</mosaic_0001>

<llo_original>
// kernel: _lambda_.1
$region0: #{_lambda_.1}
  #allocation0 [shape = 'u32[]', space=smem, size = 0x4, offset = 0x4, fixed_abs, tag = 'smem constant byte address 0x4 - core index']
  #allocation1 [shape = 'u32[72,128]{1,0:T(1,128)}', space=vmem, size = 0x9000, scoped, tag = 'internal scratch']
  #allocation2 [shape = 'f32[18,32]{1,0:T(8,128)}', space=vmem, size = 0x3000, scoped, tag = 'scratch operand']
  %s0 = inlined_call_operand.hbm [shape: f32[2,8,16], index: 0, kind: input, shape index: {}]
  %s1 = inlined_call_operand.hbm [shape: f32[2,8,32], index: 1, kind: input, shape index: {}]
  %s2 = inlined_call_operand.vmem [shape: f32[2,8,1], index: 2, kind: input, shape index: {}]
  %s3 = inlined_call_operand.hbm [shape: f32[16,32], index: 3, kind: input, shape index: {}]
  %s4 = inlined_call_operand.hbm [shape: f32[1,32], index: 4, kind: input, shape index: {}]
  %s5 = inlined_call_operand.hbm [shape: f32[3,5,32], index: 5, kind: input, shape index: {}]
  %s6 = inlined_call_operand.hbm [shape: f32[3,1,32], index: 6, kind: input, shape index: {}]
  %s7 = inlined_call_operand.vmem [shape: f32[3,1,32], index: 7, kind: input, shape index: {}, may-alias: {7,11}]
  %s8 = inlined_call_operand.vmem [shape: f32[3,1,32], index: 8, kind: input, shape index: {}, may-alias: {8,12}]
  %s9 = inlined_call_operand.hbm [shape: f32[3,32,32], index: 9, kind: input, shape index: {}]
  %s10 = inlined_call_operand.vmem [shape: f32[3,1,32], index: 10, kind: input, shape index: {}]
  %s11 = inlined_call_operand.vmem [shape: f32[3,1,32], index: 11, kind: input, shape index: {}, may-alias: {7,11}]
  %s12 = inlined_call_operand.vmem [shape: f32[3,1,32], index: 12, kind: input, shape index: {}, may-alias: {8,12}]
  %s13 = inlined_call_operand.vmem [shape: f32[32,32], index: 13, kind: input, shape index: {}]
  %s14 = inlined_call_operand.vmem [shape: f32[1,32], index: 14, kind: input, shape index: {}]
  %s15 = inlined_call_operand.hbm [shape: f32[2,8,32], index: 15, kind: output, shape index: {}]
  %s16 = sld [smem:[#allocation0]]
  $region121: #{_lambda_.1} parent=0
    _
  %s18 = ssub.s32 1, %s16
  %s19 = scalar_select 0, %s18, %s16
  $region1: #{_lambda_.1} parent=0
    #allocation3 [shape = 'u8[8192]{0}', space=vmem, size = 0x2000, scoped, tag = 'input window, operand 0']
    #allocation4 [shape = 's32[2]{0}', space=sflag, size = 0x8, scoped, tag = 'scoped memory for _lambda_.1']
    #allocation5 [shape = 's32[2]{0}', space=sflag, size = 0x8, scoped, tag = 'scoped memory for _lambda_.1']
    #allocation6 [shape = 'u8[8192]{0}', space=vmem, size = 0x2000, scoped, tag = 'input window, operand 1']
    #allocation7 [shape = 's32[2]{0}', space=sflag, size = 0x8, scoped, tag = 'scoped memory for _lambda_.1']
    #allocation8 [shape = 'u8[8192]{0}', space=vmem, size = 0x2000, scoped, tag = 'input window, operand 3, single buffered']
    #allocation9 [shape = 'u8[512]{0}', space=vmem, size = 0x400, scoped, tag = 'input window, operand 4, single buffered']
    #allocation10 [shape = 's32[1]{0}', space=sflag, size = 0x4, scoped, tag = 'scoped memory for _lambda_.1']
    #allocation11 [shape = 'u8[12288]{0}', space=vmem, size = 0x3000, scoped, tag = 'input window, operand 5, single buffered']
    #allocation12 [shape = 'u8[1536]{0}', space=vmem, size = 0x800, scoped, tag = 'input window, operand 6, single buffered']
    #allocation13 [shape = 's32[1]{0}', space=sflag, size = 0x4, scoped, tag = 'scoped memory for _lambda_.1']
    #allocation14 [shape = 'u8[49152]{0}', space=vmem, size = 0xc000, scoped, tag = 'input window, operand 9, single buffered']
    #allocation15 [shape = 'u8[8192]{0}', space=vmem, size = 0x2000, scoped, tag = 'output window, operand 0']
    %20 = vsyncpa [#allocation4], 0
    %s21 = scalar_lea.sflag [#allocation4], 1
    %22 = vsyncpa %s21, 0
    %23 = vsyncpa [#allocation7], 0
    %s24 = scalar_lea.sflag [#allocation7], 1
    %25 = vsyncpa %s24, 0
    %26 = vsyncpa [#allocation10], 0
    %27 = vsyncpa [#allocation13], 0
    %28 = vsyncpa [#allocation5], 0
    %s29 = scalar_lea.sflag [#allocation5], 1
    %30 = vsyncpa %s29, 0
    loop: start=0, step=1, limit=4
    $region2: #{_lambda_.1} parent=1 // loop_pre_header
      _
    $region3: #{_lambda_.1} parent=1 // loop_header
      %s32 = sphi 0, %s36
      %p33 = scmp.ge.s32.totalorder %s32, 4
      %s42 = sphi 0, %s44
      %s45 = sphi 0, %s42
      %s46 = sphi 0, %s45
      %s62 = sphi 0, %s46
      %s68 = sphi 0, %s70
      %s71 = sphi 0, %s68
      %s72 = sphi 0, %s71
      %s88 = sphi 0, %s72
      %s94 = sphi 0, %s96
      %s97 = sphi 0, %s94
      %s98 = sphi 0, %s97
      %s114 = sphi 0, %s98
      %s118 = sphi 0, %s118
      %s120 = sphi 0, %s118
      %s121 = sphi 0, %s120
      %s135 = sphi 0, %s121
      %s139 = sphi 0, %s139
      %s141 = sphi 0, %s139
      %s142 = sphi 0, %s141
      %s156 = sphi 0, %s142
      %s160 = sphi 0, %s160
      %s162 = sphi 0, %s160
      %s163 = sphi 0, %s162
      %s177 = sphi 0, %s163
      %s181 = sphi 0, %s181
      %s183 = sphi 0, %s181
      %s184 = sphi 0, %s183
      %s198 = sphi 0, %s184
      %s202 = sphi 0, %s202
      %s204 = sphi 0, %s202
      %s205 = sphi 0, %s204
      %s219 = sphi 0, %s205
      %s223 = sphi 0, %s223
      %s225 = sphi 0, %s223
      %s226 = sphi 0, %s225
      %s240 = sphi 0, %s226
      %s244 = sphi 0, %s244
      %s246 = sphi 0, %s244
      %s247 = sphi 0, %s246
      %s261 = sphi 0, %s247
      %s265 = sphi 0, %s265
      %s267 = sphi 0, %s265
      %s268 = sphi 0, %s267
      %s282 = sphi 0, %s268
      %s286 = sphi 0, %s286
      %s288 = sphi 0, %s286
      %s289 = sphi 0, %s288
      %s303 = sphi 0, %s289
      %s307 = sphi 0, %s307
      %s309 = sphi 0, %s307
      %s310 = sphi 0, %s309
      %s324 = sphi 0, %s310
      %s328 = sphi 0, %s328
      %s330 = sphi 0, %s328
      %s331 = sphi 0, %s330
      %s345 = sphi 0, %s331
      %s349 = sphi 0, %s349
      %s351 = sphi 0, %s349
      %s352 = sphi 0, %s351
      %s366 = sphi 0, %s352
      %s372 = sphi 0, %s374
      %s375 = sphi 0, %s372
      %s376 = sphi 0, %s375
      %s392 = sphi 0, %s376
    $region4: #{_lambda_.1} parent=1 // loop_header_branch
      %35 = sbr.rel (%p33) target = $region8
    $region5: #{_lambda_.1} parent=1 // loop_body
      %s37 = ssub.s32 %s32, 1
      %s38 = ssub.s32 %s32, 2
      %s39 = sadd.s32 %s32, 1
      %s40 = ssub.s32 %s32, %s39
      %p41 = scmp.eq.s32.totalorder %s40, 0
      %s43 = sadd.s32 %s42, 1
      %s44 = scalar_select %p41, %s42, %s43
      %p47 = pneg %p41
      %p48 = scmp.eq.s32.totalorder %s32, 1
      %p49 = por %p47, %p48
      %p50 = scmp.ne.s32.totalorder %s42, %s45
      %p51 = scmp.eq.s32.totalorder %s32, 0
      %p52 = por %p50, %p51
      %p53 = scmp.ne.s32.totalorder %s42, %s45
      %p54 = scmp.eq.s32.totalorder %s37, 1
      %p55 = por %p53, %p54
      %p56 = scmp.ne.s32.totalorder %s45, %s46
      %p57 = scmp.eq.s32.totalorder %s37, 0
      %p58 = por %p56, %p57
      %p59 = scmp.ne.s32.totalorder %s45, %s46
      %p60 = scmp.eq.s32.totalorder %s38, 1
      %p61 = por %p59, %p60
      %p63 = scmp.ne.s32.totalorder %s46, %s62
      %p64 = scmp.eq.s32.totalorder %s38, 0
      %p65 = por %p63, %p64
      %s66 = ssub.s32 %s32, %s39
      %p67 = scmp.eq.s32.totalorder %s66, 0
      %s69 = sadd.s32 %s68, 1
      %s70 = scalar_select %p67, %s68, %s69
      %p73 = pneg %p67
      %p74 = scmp.eq.s32.totalorder %s32, 1
      %p75 = por %p73, %p74
      %p76 = scmp.ne.s32.totalorder %s68, %s71
      %p77 = scmp.eq.s32.totalorder %s32, 0
      %p78 = por %p76, %p77
      %p79 = scmp.ne.s32.totalorder %s68, %s71
      %p80 = scmp.eq.s32.totalorder %s37, 1
      %p81 = por %p79, %p80
      %p82 = scmp.ne.s32.totalorder %s71, %s72
      %p83 = scmp.eq.s32.totalorder %s37, 0
      %p84 = por %p82, %p83
      %p85 = scmp.ne.s32.totalorder %s71, %s72
      %p86 = scmp.eq.s32.totalorder %s38, 1
      %p87 = por %p85, %p86
      %p89 = scmp.ne.s32.totalorder %s72, %s88
      %p90 = scmp.eq.s32.totalorder %s38, 0
      %p91 = por %p89, %p90
      %s92 = ssub.s32 %s32, %s39
      %p93 = scmp.eq.s32.totalorder %s92, 0
      %s95 = sadd.s32 %s94, 1
      %s96 = scalar_select %p93, %s94, %s95
      %p99 = pneg %p93
      %p100 = scmp.eq.s32.totalorder %s32, 1
      %p101 = por %p99, %p100
      %p102 = scmp.ne.s32.totalorder %s94, %s97
      %p103 = scmp.eq.s32.totalorder %s32, 0
      %p104 = por %p102, %p103
      %p105 = scmp.ne.s32.totalorder %s94, %s97
      %p106 = scmp.eq.s32.totalorder %s37, 1
      %p107 = por %p105, %p106
      %p108 = scmp.ne.s32.totalorder %s97, %s98
      %p109 = scmp.eq.s32.totalorder %s37, 0
      %p110 = por %p108, %p109
      %p111 = scmp.ne.s32.totalorder %s97, %s98
      %p112 = scmp.eq.s32.totalorder %s38, 1
      %p113 = por %p111, %p112
      %p115 = scmp.ne.s32.totalorder %s98, %s114
      %p116 = scmp.eq.s32.totalorder %s38, 0
      %p117 = por %p115, %p116
      %s119 = sadd.s32 %s118, 1
      %p122 = scmp.eq.s32.totalorder %s32, 1
      %p123 = scmp.ne.s32.totalorder %s118, %s120
      %p124 = scmp.eq.s32.totalorder %s32, 0
      %p125 = por %p123, %p124
      %p126 = scmp.ne.s32.totalorder %s118, %s120
      %p127 = scmp.eq.s32.totalorder %s37, 1
      %p128 = por %p126, %p127
      %p129 = scmp.ne.s32.totalorder %s120, %s121
      %p130 = scmp.eq.s32.totalorder %s37, 0
      %p131 = por %p129, %p130
      %p132 = scmp.ne.s32.totalorder %s120, %s121
      %p133 = scmp.eq.s32.totalorder %s38, 1
      %p134 = por %p132, %p133
      %p136 = scmp.ne.s32.totalorder %s121, %s135
      %p137 = scmp.eq.s32.totalorder %s38, 0
      %p138 = por %p136, %p137
      %s140 = sadd.s32 %s139, 1
      %p143 = scmp.eq.s32.totalorder %s32, 1
      %p144 = scmp.ne.s32.totalorder %s139, %s141
      %p145 = scmp.eq.s32.totalorder %s32, 0
      %p146 = por %p144, %p145
      %p147 = scmp.ne.s32.totalorder %s139, %s141
      %p148 = scmp.eq.s32.totalorder %s37, 1
      %p149 = por %p147, %p148
      %p150 = scmp.ne.s32.totalorder %s141, %s142
      %p151 = scmp.eq.s32.totalorder %s37, 0
      %p152 = por %p150, %p151
      %p153 = scmp.ne.s32.totalorder %s141, %s142
      %p154 = scmp.eq.s32.totalorder %s38, 1
      %p155 = por %p153, %p154
      %p157 = scmp.ne.s32.totalorder %s142, %s156
      %p158 = scmp.eq.s32.totalorder %s38, 0
      %p159 = por %p157, %p158
      %s161 = sadd.s32 %s160, 1
      %p164 = scmp.eq.s32.totalorder %s32, 1
      %p165 = scmp.ne.s32.totalorder %s160, %s162
      %p166 = scmp.eq.s32.totalorder %s32, 0
      %p167 = por %p165, %p166
      %p168 = scmp.ne.s32.totalorder %s160, %s162
      %p169 = scmp.eq.s32.totalorder %s37, 1
      %p170 = por %p168, %p169
      %p171 = scmp.ne.s32.totalorder %s162, %s163
      %p172 = scmp.eq.s32.totalorder %s37, 0
      %p173 = por %p171, %p172
      %p174 = scmp.ne.s32.totalorder %s162, %s163
      %p175 = scmp.eq.s32.totalorder %s38, 1
      %p176 = por %p174, %p175
      %p178 = scmp.ne.s32.totalorder %s163, %s177
      %p179 = scmp.eq.s32.totalorder %s38, 0
      %p180 = por %p178, %p179
      %s182 = sadd.s32 %s181, 1
      %p185 = scmp.eq.s32.totalorder %s32, 1
      %p186 = scmp.ne.s32.totalorder %s181, %s183
      %p187 = scmp.eq.s32.totalorder %s32, 0
      %p188 = por %p186, %p187
      %p189 = scmp.ne.s32.totalorder %s181, %s183
      %p190 = scmp.eq.s32.totalorder %s37, 1
      %p191 = por %p189, %p190
      %p192 = scmp.ne.s32.totalorder %s183, %s184
      %p193 = scmp.eq.s32.totalorder %s37, 0
      %p194 = por %p192, %p193
      %p195 = scmp.ne.s32.totalorder %s183, %s184
      %p196 = scmp.eq.s32.totalorder %s38, 1
      %p197 = por %p195, %p196
      %p199 = scmp.ne.s32.totalorder %s184, %s198
      %p200 = scmp.eq.s32.totalorder %s38, 0
      %p201 = por %p199, %p200
      %s203 = sadd.s32 %s202, 1
      %p206 = scmp.eq.s32.totalorder %s32, 1
      %p207 = scmp.ne.s32.totalorder %s202, %s204
      %p208 = scmp.eq.s32.totalorder %s32, 0
      %p209 = por %p207, %p208
      %p210 = scmp.ne.s32.totalorder %s202, %s204
      %p211 = scmp.eq.s32.totalorder %s37, 1
      %p212 = por %p210, %p211
      %p213 = scmp.ne.s32.totalorder %s204, %s205
      %p214 = scmp.eq.s32.totalorder %s37, 0
      %p215 = por %p213, %p214
      %p216 = scmp.ne.s32.totalorder %s204, %s205
      %p217 = scmp.eq.s32.totalorder %s38, 1
      %p218 = por %p216, %p217
      %p220 = scmp.ne.s32.totalorder %s205, %s219
      %p221 = scmp.eq.s32.totalorder %s38, 0
      %p222 = por %p220, %p221
      %s224 = sadd.s32 %s223, 1
      %p227 = scmp.eq.s32.totalorder %s32, 1
      %p228 = scmp.ne.s32.totalorder %s223, %s225
      %p229 = scmp.eq.s32.totalorder %s32, 0
      %p230 = por %p228, %p229
      %p231 = scmp.ne.s32.totalorder %s223, %s225
      %p232 = scmp.eq.s32.totalorder %s37, 1
      %p233 = por %p231, %p232
      %p234 = scmp.ne.s32.totalorder %s225, %s226
      %p235 = scmp.eq.s32.totalorder %s37, 0
      %p236 = por %p234, %p235
      %p237 = scmp.ne.s32.totalorder %s225, %s226
      %p238 = scmp.eq.s32.totalorder %s38, 1
      %p239 = por %p237, %p238
      %p241 = scmp.ne.s32.totalorder %s226, %s240
      %p242 = scmp.eq.s32.totalorder %s38, 0
      %p243 = por %p241, %p242
      %s245 = sadd.s32 %s244, 1
      %p248 = scmp.eq.s32.totalorder %s32, 1
      %p249 = scmp.ne.s32.totalorder %s244, %s246
      %p250 = scmp.eq.s32.totalorder %s32, 0
      %p251 = por %p249, %p250
      %p252 = scmp.ne.s32.totalorder %s244, %s246
      %p253 = scmp.eq.s32.totalorder %s37, 1
      %p254 = por %p252, %p253
      %p255 = scmp.ne.s32.totalorder %s246, %s247
      %p256 = scmp.eq.s32.totalorder %s37, 0
      %p257 = por %p255, %p256
      %p258 = scmp.ne.s32.totalorder %s246, %s247
      %p259 = scmp.eq.s32.totalorder %s38, 1
      %p260 = por %p258, %p259
      %p262 = scmp.ne.s32.totalorder %s247, %s261
      %p263 = scmp.eq.s32.totalorder %s38, 0
      %p264 = por %p262, %p263
      %s266 = sadd.s32 %s265, 1
      %p269 = scmp.eq.s32.totalorder %s32, 1
      %p270 = scmp.ne.s32.totalorder %s265, %s267
      %p271 = scmp.eq.s32.totalorder %s32, 0
      %p272 = por %p270, %p271
      %p273 = scmp.ne.s32.totalorder %s265, %s267
      %p274 = scmp.eq.s32.totalorder %s37, 1
      %p275 = por %p273, %p274
      %p276 = scmp.ne.s32.totalorder %s267, %s268
      %p277 = scmp.eq.s32.totalorder %s37, 0
      %p278 = por %p276, %p277
      %p279 = scmp.ne.s32.totalorder %s267, %s268
      %p280 = scmp.eq.s32.totalorder %s38, 1
      %p281 = por %p279, %p280
      %p283 = scmp.ne.s32.totalorder %s268, %s282
      %p284 = scmp.eq.s32.totalorder %s38, 0
      %p285 = por %p283, %p284
      %s287 = sadd.s32 %s286, 1
      %p290 = scmp.eq.s32.totalorder %s32, 1
      %p291 = scmp.ne.s32.totalorder %s286, %s288
      %p292 = scmp.eq.s32.totalorder %s32, 0
      %p293 = por %p291, %p292
      %p294 = scmp.ne.s32.totalorder %s286, %s288
      %p295 = scmp.eq.s32.totalorder %s37, 1
      %p296 = por %p294, %p295
      %p297 = scmp.ne.s32.totalorder %s288, %s289
      %p298 = scmp.eq.s32.totalorder %s37, 0
      %p299 = por %p297, %p298
      %p300 = scmp.ne.s32.totalorder %s288, %s289
      %p301 = scmp.eq.s32.totalorder %s38, 1
      %p302 = por %p300, %p301
      %p304 = scmp.ne.s32.totalorder %s289, %s303
      %p305 = scmp.eq.s32.totalorder %s38, 0
      %p306 = por %p304, %p305
      %s308 = sadd.s32 %s307, 1
      %p311 = scmp.eq.s32.totalorder %s32, 1
      %p312 = scmp.ne.s32.totalorder %s307, %s309
      %p313 = scmp.eq.s32.totalorder %s32, 0
      %p314 = por %p312, %p313
      %p315 = scmp.ne.s32.totalorder %s307, %s309
      %p316 = scmp.eq.s32.totalorder %s37, 1
      %p317 = por %p315, %p316
      %p318 = scmp.ne.s32.totalorder %s309, %s310
      %p319 = scmp.eq.s32.totalorder %s37, 0
      %p320 = por %p318, %p319
      %p321 = scmp.ne.s32.totalorder %s309, %s310
      %p322 = scmp.eq.s32.totalorder %s38, 1
      %p323 = por %p321, %p322
      %p325 = scmp.ne.s32.totalorder %s310, %s324
      %p326 = scmp.eq.s32.totalorder %s38, 0
      %p327 = por %p325, %p326
      %s329 = sadd.s32 %s328, 1
      %p332 = scmp.eq.s32.totalorder %s32, 1
      %p333 = scmp.ne.s32.totalorder %s328, %s330
      %p334 = scmp.eq.s32.totalorder %s32, 0
      %p335 = por %p333, %p334
      %p336 = scmp.ne.s32.totalorder %s328, %s330
      %p337 = scmp.eq.s32.totalorder %s37, 1
      %p338 = por %p336, %p337
      %p339 = scmp.ne.s32.totalorder %s330, %s331
      %p340 = scmp.eq.s32.totalorder %s37, 0
      %p341 = por %p339, %p340
      %p342 = scmp.ne.s32.totalorder %s330, %s331
      %p343 = scmp.eq.s32.totalorder %s38, 1
      %p344 = por %p342, %p343
      %p346 = scmp.ne.s32.totalorder %s331, %s345
      %p347 = scmp.eq.s32.totalorder %s38, 0
      %p348 = por %p346, %p347
      %s350 = sadd.s32 %s349, 1
      %p353 = scmp.eq.s32.totalorder %s32, 1
      %p354 = scmp.ne.s32.totalorder %s349, %s351
      %p355 = scmp.eq.s32.totalorder %s32, 0
      %p356 = por %p354, %p355
      %p357 = scmp.ne.s32.totalorder %s349, %s351
      %p358 = scmp.eq.s32.totalorder %s37, 1
      %p359 = por %p357, %p358
      %p360 = scmp.ne.s32.totalorder %s351, %s352
      %p361 = scmp.eq.s32.totalorder %s37, 0
      %p362 = por %p360, %p361
      %p363 = scmp.ne.s32.totalorder %s351, %s352
      %p364 = scmp.eq.s32.totalorder %s38, 1
      %p365 = por %p363, %p364
      %p367 = scmp.ne.s32.totalorder %s352, %s366
      %p368 = scmp.eq.s32.totalorder %s38, 0
      %p369 = por %p367, %p368
      %s370 = ssub.s32 %s32, %s39
      %p371 = scmp.eq.s32.totalorder %s370, 0
      %s373 = sadd.s32 %s372, 1
      %s374 = scalar_select %p371, %s372, %s373
      %p377 = pneg %p371
      %p378 = scmp.eq.s32.totalorder %s32, 1
      %p379 = por %p377, %p378
      %p380 = scmp.ne.s32.totalorder %s372, %s375
      %p381 = scmp.eq.s32.totalorder %s32, 0
      %p382 = por %p380, %p381
      %p383 = scmp.ne.s32.totalorder %s372, %s375
      %p384 = scmp.eq.s32.totalorder %s37, 1
      %p385 = por %p383, %p384
      %p386 = scmp.ne.s32.totalorder %s375, %s376
      %p387 = scmp.eq.s32.totalorder %s37, 0
      %p388 = por %p386, %p387
      %p389 = scmp.ne.s32.totalorder %s375, %s376
      %p390 = scmp.eq.s32.totalorder %s38, 1
      %p391 = por %p389, %p390
      %p393 = scmp.ne.s32.totalorder %s376, %s392
      %p394 = scmp.eq.s32.totalorder %s38, 0
      %p395 = por %p393, %p394
      %p396 = scmp.le.s32.totalorder 1, %s32
      %p397 = scmp.lt.s32.totalorder %s32, 3
      %p398 = pnand %p396, %p397
      %p399 = pneg %p398
      // Predicated region
      $region9: #{_lambda_.1} parent=5 // pred_check
        _
      $region10: #{_lambda_.1} parent=5 // pred_check_branch
        %401 = sbr.rel (%p398) target = $region12
      $region11: #{_lambda_.1} parent=5 // pred_region
        %s402 = ssub.s32 %s32, 1
        // Predicated region
        $region13: #{_lambda_.1} parent=11 // pred_check
          %p403 = pneg %p131
        $region14: #{_lambda_.1} parent=11 // pred_check_branch
          %405 = sbr.rel (%p403) target = $region16
        $region15: #{_lambda_.1} parent=11 // pred_region
          %407 = vsyncadd [#allocation7], 0
          %s408 = sshll.u32 %s3, 4
          %s409 = int_to_ptr.hbm [resolvable:$true] %s408
          %s410 = sshll.u32 [#allocation8], 4
          %s411 = int_to_ptr.vmem [resolvable:$true] %s410
          %416 = dma.hbm_to_vmem [thread:$0]  %s409, 256, %s411, [#allocation7], 128, 128, 8
        $region16: #{_lambda_.1} parent=11 // pred_fallthru
          _
        // Predicated region
        $region17: #{_lambda_.1} parent=11 // pred_check
          %p417 = pneg %p152
        $region18: #{_lambda_.1} parent=11 // pred_check_branch
          %419 = sbr.rel (%p417) target = $region20
        $region19: #{_lambda_.1} parent=11 // pred_region
          %421 = vsyncadd [#allocation10], 0
          %s423 = sshll.u32 %s4, 4
          %s424 = int_to_ptr.hbm [resolvable:$true] %s423
          %s425 = sshll.u32 [#allocation9], 4
          %s426 = int_to_ptr.vmem [resolvable:$true] %s425
          %428 = dma.hbm_to_vmem [thread:$0]  %s424, 16, %s426, [#allocation10]
        $region20: #{_lambda_.1} parent=11 // pred_fallthru
          _
        // Predicated region
        $region21: #{_lambda_.1} parent=11 // pred_check
          %p429 = pneg %p173
        $region22: #{_lambda_.1} parent=11 // pred_check_branch
          %431 = sbr.rel (%p429) target = $region24
        $region23: #{_lambda_.1} parent=11 // pred_region
          %433 = vsyncadd [#allocation10], 0
          %s434 = sshll.u32 %s5, 4
          %s435 = int_to_ptr.hbm [resolvable:$true] %s434
          %s436 = sshll.u32 [#allocation11], 4
          %s437 = int_to_ptr.vmem [resolvable:$true] %s436
          %442 = dma.hbm_to_vmem [thread:$0]  %s435, 384, %s437, [#allocation10], 128, 128, 8
        $region24: #{_lambda_.1} parent=11 // pred_fallthru
          _
        // Predicated region
        $region25: #{_lambda_.1} parent=11 // pred_check
          %p443 = pneg %p194
        $region26: #{_lambda_.1} parent=11 // pred_check_branch
          %445 = sbr.rel (%p443) target = $region28
        $region27: #{_lambda_.1} parent=11 // pred_region
          %447 = vsyncadd [#allocation13], 0
          %s448 = sshll.u32 %s6, 4
          %s449 = int_to_ptr.hbm [resolvable:$true] %s448
          %s450 = sshll.u32 [#allocation12], 4
          %s451 = int_to_ptr.vmem [resolvable:$true] %s450
          %456 = dma.hbm_to_vmem [thread:$0]  %s449, 48, %s451, [#allocation13], 16, 16, 1
        $region28: #{_lambda_.1} parent=11 // pred_fallthru
          _
        // Predicated region
        $region29: #{_lambda_.1} parent=11 // pred_check
          %p457 = pneg %p215
        $region30: #{_lambda_.1} parent=11 // pred_check_branch
          %459 = sbr.rel (%p457) target = $region32
        $region31: #{_lambda_.1} parent=11 // pred_region
          _
        $region32: #{_lambda_.1} parent=11 // pred_fallthru
          _
        // Predicated region
        $region33: #{_lambda_.1} parent=11 // pred_check
          %p460 = pneg %p236
        $region34: #{_lambda_.1} parent=11 // pred_check_branch
          %462 = sbr.rel (%p460) target = $region36
        $region35: #{_lambda_.1} parent=11 // pred_region
          _
        $region36: #{_lambda_.1} parent=11 // pred_fallthru
          _
        // Predicated region
        $region37: #{_lambda_.1} parent=11 // pred_check
          %p463 = pneg %p257
        $region38: #{_lambda_.1} parent=11 // pred_check_branch
          %465 = sbr.rel (%p463) target = $region40
        $region39: #{_lambda_.1} parent=11 // pred_region
          %467 = vsyncadd [#allocation13], 0
          %s468 = sshll.u32 %s9, 4
          %s469 = int_to_ptr.hbm [resolvable:$true] %s468
          %s470 = sshll.u32 [#allocation14], 4
          %s471 = int_to_ptr.vmem [resolvable:$true] %s470
          %476 = dma.hbm_to_vmem [thread:$0]  %s469, 1536, %s471, [#allocation13], 128, 128, 8
        $region40: #{_lambda_.1} parent=11 // pred_fallthru
          _
        // Predicated region
        $region41: #{_lambda_.1} parent=11 // pred_check
          %p477 = pneg %p278
        $region42: #{_lambda_.1} parent=11 // pred_check_branch
          %479 = sbr.rel (%p477) target = $region44
        $region43: #{_lambda_.1} parent=11 // pred_region
          _
        $region44: #{_lambda_.1} parent=11 // pred_fallthru
          _
        // Predicated region
        $region45: #{_lambda_.1} parent=11 // pred_check
          %p480 = pneg %p299
        $region46: #{_lambda_.1} parent=11 // pred_check_branch
          %482 = sbr.rel (%p480) target = $region48
        $region47: #{_lambda_.1} parent=11 // pred_region
          _
        $region48: #{_lambda_.1} parent=11 // pred_fallthru
          _
        // Predicated region
        $region49: #{_lambda_.1} parent=11 // pred_check
          %p483 = pneg %p320
        $region50: #{_lambda_.1} parent=11 // pred_check_branch
          %485 = sbr.rel (%p483) target = $region52
        $region51: #{_lambda_.1} parent=11 // pred_region
          _
        $region52: #{_lambda_.1} parent=11 // pred_fallthru
          _
        // Predicated region
        $region53: #{_lambda_.1} parent=11 // pred_check
          %p486 = pneg %p341
        $region54: #{_lambda_.1} parent=11 // pred_check_branch
          %488 = sbr.rel (%p486) target = $region56
        $region55: #{_lambda_.1} parent=11 // pred_region
          _
        $region56: #{_lambda_.1} parent=11 // pred_fallthru
          _
        // Predicated region
        $region57: #{_lambda_.1} parent=11 // pred_check
          %p489 = pneg %p362
        $region58: #{_lambda_.1} parent=11 // pred_check_branch
          %491 = sbr.rel (%p489) target = $region60
        $region59: #{_lambda_.1} parent=11 // pred_region
          _
        $region60: #{_lambda_.1} parent=11 // pred_fallthru
          _
      $region12: #{_lambda_.1} parent=5 // pred_fallthru
        _
      %p492 = scmp.lt.s32.totalorder %s32, 2
      // Predicated region
      $region61: #{_lambda_.1} parent=5 // pred_check
        %p493 = pneg %p492
      $region62: #{_lambda_.1} parent=5 // pred_check_branch
        %495 = sbr.rel (%p493) target = $region64
      $region63: #{_lambda_.1} parent=5 // pred_region
        // Predicated region
        $region65: #{_lambda_.1} parent=63 // pred_check
          %p496 = pneg %p52
        $region66: #{_lambda_.1} parent=63 // pred_check_branch
          %498 = sbr.rel (%p496) target = $region68
        $region67: #{_lambda_.1} parent=63 // pred_region
          %s499 = sand.u32 %s42, 1
          %s500 = scalar_lea.sflag [#allocation4], %s499
          %s501 = sand.u32 %s42, 1
          %s502 = smul.addr %s501, 8
          %s503 = scalar_lea.vmem [#allocation3], %s502
          %505 = vsyncadd %s500, 0
          %s506 = smul.addr %s32, 8
          %s507 = scalar_lea.hbm %s0, %s506
          %s509 = sshll.u32 %s507, 4
          %s510 = int_to_ptr.hbm [resolvable:$true] %s509
          %s511 = sshll.u32 %s503, 4
          %s512 = int_to_ptr.vmem [resolvable:$true] %s511
          %514 = dma.hbm_to_vmem [thread:$0]  %s510, 128, %s512, %s500
        $region68: #{_lambda_.1} parent=63 // pred_fallthru
          _
        // Predicated region
        $region69: #{_lambda_.1} parent=63 // pred_check
          %p515 = pneg %p78
        $region70: #{_lambda_.1} parent=63 // pred_check_branch
          %517 = sbr.rel (%p515) target = $region72
        $region71: #{_lambda_.1} parent=63 // pred_region
          %s518 = sand.u32 %s32, 1
          %s519 = scalar_lea.sflag [#allocation7], %s518
          %s520 = sand.u32 %s68, 1
          %s521 = smul.addr %s520, 8
          %s522 = scalar_lea.vmem [#allocation6], %s521
          %524 = vsyncadd %s519, 0
          %s525 = smul.addr %s32, 8
          %s526 = scalar_lea.hbm %s1, %s525
          %s528 = sshll.u32 %s526, 4
          %s529 = int_to_ptr.hbm [resolvable:$true] %s528
          %s530 = sshll.u32 %s522, 4
          %s531 = int_to_ptr.vmem [resolvable:$true] %s530
          %533 = dma.hbm_to_vmem [thread:$0]  %s529, 128, %s531, %s519
        $region72: #{_lambda_.1} parent=63 // pred_fallthru
          _
        // Predicated region
        $region73: #{_lambda_.1} parent=63 // pred_check
          %p534 = pneg %p104
        $region74: #{_lambda_.1} parent=63 // pred_check_branch
          %536 = sbr.rel (%p534) target = $region76
        $region75: #{_lambda_.1} parent=63 // pred_region
          %p537 = scmp.lt.s32.totalorder %s32, 1
          %s538 = scalar_select %p537, %s32, 1
          %s539 = smul.addr %s538, 8
          %s540 = scalar_lea.vmem %s2, %s539
        $region76: #{_lambda_.1} parent=63 // pred_fallthru
          _
      $region64: #{_lambda_.1} parent=5 // pred_fallthru
        _
      %p541 = scmp.le.s32.totalorder 1, %s32
      %p542 = scmp.lt.s32.totalorder %s32, 3
      %p543 = pnand %p541, %p542
      %p544 = pneg %p543
      // Predicated region
      $region77: #{_lambda_.1} parent=5 // pred_check
        _
      $region78: #{_lambda_.1} parent=5 // pred_check_branch
        %546 = sbr.rel (%p543) target = $region80
      $region79: #{_lambda_.1} parent=5 // pred_region
        %s547 = ssub.s32 %s32, 1
        %s548 = sand.u32 %s45, 1
        %s549 = scalar_lea.sflag [#allocation4], %s548
        %s550 = sand.u32 %s45, 1
        %s551 = smul.addr %s550, 8
        %s552 = scalar_lea.vmem [#allocation3], %s551
        // Predicated region
        $region81: #{_lambda_.1} parent=79 // pred_check
          %p553 = pneg %p58
        $region82: #{_lambda_.1} parent=79 // pred_check_branch
          %555 = sbr.rel (%p553) target = $region84
        $region83: #{_lambda_.1} parent=79 // pred_region
          %557 = dma.done %s549, 128
        $region84: #{_lambda_.1} parent=79 // pred_fallthru
          _
        %s558 = sand.u32 %s37, 1
        %s559 = scalar_lea.sflag [#allocation7], %s558
        %s560 = sand.u32 %s71, 1
        %s561 = smul.addr %s560, 8
        %s562 = scalar_lea.vmem [#allocation6], %s561
        // Predicated region
        $region85: #{_lambda_.1} parent=79 // pred_check
          %p563 = pneg %p84
        $region86: #{_lambda_.1} parent=79 // pred_check_branch
          %565 = sbr.rel (%p563) target = $region88
        $region87: #{_lambda_.1} parent=79 // pred_region
          %567 = dma.done %s559, 128
        $region88: #{_lambda_.1} parent=79 // pred_fallthru
          _
        // Predicated region
        $region89: #{_lambda_.1} parent=79 // pred_check
          %p568 = pneg %p131
        $region90: #{_lambda_.1} parent=79 // pred_check_branch
          %570 = sbr.rel (%p568) target = $region92
        $region91: #{_lambda_.1} parent=79 // pred_region
          %572 = dma.done [#allocation7], 256
        $region92: #{_lambda_.1} parent=79 // pred_fallthru
          _
        // Predicated region
        $region93: #{_lambda_.1} parent=79 // pred_check
          %p573 = pneg %p152
        $region94: #{_lambda_.1} parent=79 // pred_check_branch
          %575 = sbr.rel (%p573) target = $region96
        $region95: #{_lambda_.1} parent=79 // pred_region
          %577 = dma.done [#allocation10], 16
        $region96: #{_lambda_.1} parent=79 // pred_fallthru
          _
        // Predicated region
        $region97: #{_lambda_.1} parent=79 // pred_check
          %p578 = pneg %p173
        $region98: #{_lambda_.1} parent=79 // pred_check_branch
          %580 = sbr.rel (%p578) target = $region100
        $region99: #{_lambda_.1} parent=79 // pred_region
          %582 = dma.done [#allocation10], 384
        $region100: #{_lambda_.1} parent=79 // pred_fallthru
          _
        // Predicated region
        $region101: #{_lambda_.1} parent=79 // pred_check
          %p583 = pneg %p194
        $region102: #{_lambda_.1} parent=79 // pred_check_branch
          %585 = sbr.rel (%p583) target = $region104
        $region103: #{_lambda_.1} parent=79 // pred_region
          %587 = dma.done [#allocation13], 48
        $region104: #{_lambda_.1} parent=79 // pred_fallthru
          _
        // Predicated region
        $region105: #{_lambda_.1} parent=79 // pred_check
          %p588 = pneg %p257
        $region106: #{_lambda_.1} parent=79 // pred_check_branch
          %590 = sbr.rel (%p588) target = $region108
        $region107: #{_lambda_.1} parent=79 // pred_region
          %592 = dma.done [#allocation13], 1536
        $region108: #{_lambda_.1} parent=79 // pred_fallthru
          _
        %s593 = sand.u32 %s45, 1
        %s594 = scalar_lea.sflag [#allocation4], %s593
        %s595 = sand.u32 %s45, 1
        %s596 = smul.addr %s595, 8
        %s597 = scalar_lea.vmem [#allocation3], %s596
        %p598 = pneg %p58
        %p599 = pneg %p55
        %s600 = sand.u32 %s37, 1
        %s601 = scalar_lea.sflag [#allocation7], %s600
        %s602 = sand.u32 %s71, 1
        %s603 = smul.addr %s602, 8
        %s604 = scalar_lea.vmem [#allocation6], %s603
        %p605 = pneg %p84
        %p606 = pneg %p81
        %p607 = scmp.lt.s32.totalorder %s37, 1
        %s608 = scalar_select %p607, %s37, 1
        %s609 = smul.addr %s608, 8
        %s610 = scalar_lea.vmem %s2, %s609
        %p611 = pneg %p110
        %p612 = pneg %p107
        %p613 = pneg %p131
        %p614 = pneg %p128
        %p615 = pneg %p152
        %p616 = pneg %p149
        %p617 = pneg %p173
        %p618 = pneg %p170
        %p619 = pneg %p194
        %p620 = pneg %p191
        %p621 = pneg %p215
        %p622 = pneg %p212
        %p623 = pneg %p236
        %p624 = pneg %p233
        %p625 = pneg %p257
        %p626 = pneg %p254
        %p627 = pneg %p278
        %p628 = pneg %p275
        %p629 = pneg %p299
        %p630 = pneg %p296
        %p631 = pneg %p320
        %p632 = pneg %p317
        %p633 = pneg %p341
        %p634 = pneg %p338
        %p635 = pneg %p362
        %p636 = pneg %p359
        %p637 = pneg %p388
        %p638 = pneg %p385
        %s639 = sand.u32 %s375, 1
        %s640 = scalar_lea.sflag [#allocation5], %s639
        %s641 = sand.u32 %s375, 1
        %s642 = smul.addr %s641, 8
        %s643 = scalar_lea.vmem [#allocation15], %s642
        %p644 = scmp.lt.s32.totalorder %s37, 1
        %s645 = scalar_select %p644, %s37, 1
        %s646 = smul.addr %s645, 8
        %s647 = scalar_lea.vmem %s2, %s646
        %vm649 = vcmask 258048
        %650 = vst.msk [vmem:[#allocation2] sm:$0x1f] %vm649, 0.0
        %651 = vst.msk [vmem:[#allocation2 + $0xd] sm:$0x1f] %vm649, 0.0
        %v652 = vld [vmem:[#allocation11] sm:$0x1f]
        %v653 = vld [vmem:[#allocation12] sm:$0x1]
        %v654 = vld [vmem:[%s7] sm:$0x1]
        %v655 = vld [vmem:[%s8] sm:$0x1]
        %v656 = vld [vmem:[#allocation14] sm:$0xff]
        %v657 = vld [vmem:[#allocation14 + $0x8] sm:$0xff]
        %v658 = vld [vmem:[#allocation14 + $0x10] sm:$0xff]
        %v659 = vld [vmem:[#allocation14 + $0x18] sm:$0xff]
        %v660 = vld [vmem:[%s10] sm:$0x1]
        %v661 = vld [vmem:[%s11] sm:$0x1]
        %v662 = vld [vmem:[%s12] sm:$0x1]
        %s663 = scalar_lea.vmem [#allocation11], 8
        %v664 = vld [vmem:[%s663] sm:$0x1f]
        %s665 = scalar_lea.vmem [#allocation12], 1
        %v666 = vld [vmem:[%s665] sm:$0x1]
        %s667 = scalar_lea.vmem %s7, 1
        %v668 = vld [vmem:[%s667] sm:$0x1]
        %s669 = scalar_lea.vmem %s8, 1
        %v670 = vld [vmem:[%s669] sm:$0x1]
        %s671 = scalar_lea.vmem [#allocation14], 32
        %v672 = vld [vmem:[%s671] sm:$0xff]
        %v673 = vld [vmem:[%s671 + $0x8] sm:$0xff]
        %v674 = vld [vmem:[%s671 + $0x10] sm:$0xff]
        %v675 = vld [vmem:[%s671 + $0x18] sm:$0xff]
        %s676 = scalar_lea.vmem %s10, 1
        %v677 = vld [vmem:[%s676] sm:$0x1]
        %s678 = scalar_lea.vmem %s11, 1
        %v679 = vld [vmem:[%s678] sm:$0x1]
        %s680 = scalar_lea.vmem %s12, 1
        %v681 = vld [vmem:[%s680] sm:$0x1]
        %s682 = scalar_lea.vmem [#allocation11], 16
        %v683 = vld [vmem:[%s682] sm:$0x1f]
        %s684 = scalar_lea.vmem [#allocation12], 2
        %v685 = vld [vmem:[%s684] sm:$0x1]
        %s686 = scalar_lea.vmem %s7, 2
        %v687 = vld [vmem:[%s686] sm:$0x1]
        %s688 = scalar_lea.vmem %s8, 2
        %v689 = vld [vmem:[%s688] sm:$0x1]
        %s690 = scalar_lea.vmem [#allocation14], 64
        %v691 = vld [vmem:[%s690] sm:$0xff]
        %v692 = vld [vmem:[%s690 + $0x8] sm:$0xff]
        %v693 = vld [vmem:[%s690 + $0x10] sm:$0xff]
        %v694 = vld [vmem:[%s690 + $0x18] sm:$0xff]
        %s695 = scalar_lea.vmem %s10, 2
        %v696 = vld [vmem:[%s695] sm:$0x1]
        %s697 = scalar_lea.vmem %s11, 2
        %v698 = vld [vmem:[%s697] sm:$0x1]
        %s699 = scalar_lea.vmem %s12, 2
        %v700 = vld [vmem:[%s699] sm:$0x1]
        %v701 = vld [vmem:[%s552] sm:$0xff]
        %v702 = vld [vmem:[%s562] sm:$0xff]
        %v703 = vld [vmem:[%s647] sm:$0xff]
        %v704 = vld [vmem:[#allocation8] sm:$0xff]
        %v705 = vld [vmem:[#allocation8 + $0x8] sm:$0xff]
        %v706 = vld [vmem:[#allocation9] sm:$0x1]
        %v707 = vld [vmem:[%s13] sm:$0xff]
        %v708 = vld [vmem:[%s13 + $0x8] sm:$0xff]
        %v709 = vld [vmem:[%s13 + $0x10] sm:$0xff]
        %v710 = vld [vmem:[%s13 + $0x18] sm:$0xff]
        %v711 = vld [vmem:[%s14] sm:$0x1]
        %v712 = vpack.c.bf16 %v701, %v701
        %v713 = vpack.c.bf16 %v705, %v704
        %v715 = vperm.slane %v706, 0
        %vm717 = vcmask 130048
        %v719 = vsel %vm717, %v712, 0
        %721 = vmatpush.bf16.msra.mxu0 0
        %722 = vmatpush.bf16.msra.mxu0 0
        %723 = vmatpush.bf16.msra.mxu0 0
        %724 = vmatpush.bf16.msra.mxu0 0
        %725 = vmatpush.bf16.msra.mxu0 0
        %726 = vmatpush.bf16.msra.mxu0 0
        %727 = vmatpush.bf16.msra.mxu0 0
        %728 = vmatpush.bf16.msra.mxu0 %v713
        %729 = vmatmul.bf16.gmra.mxu0 %v719
        %v730 = vpop.f32.mrf.mxu0
        %v731 = vadd.f32 %v715, %v730
        %v732 = vpop.f32.mrf.mxu0
        %733 = vdwg.mxu0
        %v734 = vadd.f32 %v731, %v702
        %736 = vset.pattern.permute.xlu0 0
        %737 = vperm.xlu0 %736, %v703
        %v738 = vpop.permute.xlu0 %737
        %v740 = vmul.f32 %v734, %v738
        %vm741 = vcmask 261120
        %742 = vst.msk [vmem:[#allocation2 + $0x5] sm:$0xff] %vm741, %v740
        %v744 = vperm.slane %v653, 0
        %v746 = vadd.f32 %v744, 0.0
        %v747 = vld [vmem:[#allocation2 + $0x3] sm:$0xff]
        %v748 = vperm.slane %v652, 0
        %v749 = vmul.f32 %v747, %v748
        %v750 = vadd.f32 %v746, %v749
        %v751 = vld [vmem:[#allocation2 + $0x4] sm:$0xff]
        %v752 = vperm.slane %v652, 1
        %v753 = vmul.f32 %v751, %v752
        %v754 = vadd.f32 %v750, %v753
        %v755 = vld [vmem:[#allocation2 + $0x5] sm:$0xff]
        %v756 = vperm.slane %v652, 2
        %v757 = vmul.f32 %v755, %v756
        %v758 = vadd.f32 %v754, %v757
        %v759 = vld [vmem:[#allocation2 + $0x6] sm:$0xff]
        %v760 = vperm.slane %v652, 3
        %v761 = vmul.f32 %v759, %v760
        %v762 = vadd.f32 %v758, %v761
        %v763 = vld [vmem:[#allocation2 + $0x7] sm:$0xff]
        %v764 = vperm.slane %v652, 4
        %v765 = vmul.f32 %v763, %v764
        %v766 = vadd.f32 %v762, %v765
        %v767 = vsel %vm741, %v766, 0.0
        %768 = vadd.xlane.f32.xlu0 %v767
        %v769 = vpop.xlane.xlu0 %768
        %v770 = vrcp.pop 32.0
        %v771 = vmul.f32 32.0, %v770
        %v772 = vsub.f32 1.0, %v771
        %v773 = vmul.f32 %v770, %v772
        %v774 = vadd.f32 %v770, %v773
        %vm775 = vweird.f32 %v770
        %v776 = vsel %vm775, %v770, %v774
        %v777 = vmul.f32 %v769, %v776
        %v778 = vsub.f32 %v766, %v777
        %v779 = vmul.f32 %v778, %v778
        %v780 = vsel %vm741, %v779, 0.0
        %781 = vadd.xlane.f32.xlu0 %v780
        %v782 = vpop.xlane.xlu0 %781
        %v783 = vmul.f32 %v782, %v776
        %v784 = vadd.f32 %v783, 1e-05
        %v785 = vrsqrt.pop %v784
        %v786 = vmul.f32 %v785, %v784
        %v787 = vmul.f32 %v786, %v785
        %v788 = vmul.f32 0.5, %v787
        %v789 = vsub.f32 1.5, %v788
        %v790 = vmul.f32 %v785, %v789
        %vm791 = vweird.f32 %v784
        %vm792 = vweird.f32 %v785
        %vm793 = vmor %vm791, %vm792
        %v794 = vsel %vm793, %v785, %v790
        %v795 = vmul.f32 %v778, %v794
        %v797 = vperm.slane %v654, 0
        %v799 = vmul.f32 %v795, %v797
        %v801 = vperm.slane %v655, 0
        %v803 = vadd.f32 %v799, %v801
        %v804 = vmul.f32 %v803, 0.5
        %v805 = vmul.f32 %v803, 0.044715
        %v806 = vmul.f32 %v805, %v803
        %v807 = vmul.f32 %v806, %v803
        %v808 = vadd.f32 %v803, %v807
        %v809 = vmul.f32 %v808, 0.7978846
        %v810 = vtanh.pop %v809
        %v811 = vadd.f32 %v810, 1.0
        %v812 = vmul.f32 %v804, %v811
        %v813 = vpack.c.bf16 %v812, %v812
        %v814 = vpack.c.bf16 %v657, %v656
        %v815 = vpack.c.bf16 %v659, %v658
        %v817 = vperm.slane %v660, 0
        %v820 = vsel %vm741, %v813, 0
        %822 = vmatpush.bf16.msra.mxu0 0
        %823 = vmatpush.bf16.msra.mxu0 0
        %824 = vmatpush.bf16.msra.mxu0 0
        %825 = vmatpush.bf16.msra.mxu0 0
        %826 = vmatpush.bf16.msra.mxu0 0
        %827 = vmatpush.bf16.msra.mxu0 0
        %828 = vmatpush.bf16.msra.mxu0 %v815
        %829 = vmatpush.bf16.msra.mxu0 %v814
        %830 = vmatmul.bf16.gmra.mxu0 %v820
        %v831 = vpop.f32.mrf.mxu0
        %v832 = vadd.f32 %v817, %v831
        %v833 = vpop.f32.mrf.mxu0
        %834 = vdwg.mxu0
        %v835 = vsel %vm741, %v832, 0.0
        %836 = vadd.xlane.f32.xlu0 %v835
        %v837 = vpop.xlane.xlu0 %836
        %v838 = vmul.f32 %v837, %v776
        %v839 = vsub.f32 %v832, %v838
        %v840 = vmul.f32 %v839, %v839
        %v841 = vsel %vm741, %v840, 0.0
        %842 = vadd.xlane.f32.xlu0 %v841
        %v843 = vpop.xlane.xlu0 %842
        %v844 = vmul.f32 %v843, %v776
        %v845 = vadd.f32 %v844, 1e-05
        %v846 = vrsqrt.pop %v845
        %v847 = vmul.f32 %v846, %v845
        %v848 = vmul.f32 %v847, %v846
        %v849 = vmul.f32 0.5, %v848
        %v850 = vsub.f32 1.5, %v849
        %v851 = vmul.f32 %v846, %v850
        %vm852 = vweird.f32 %v845
        %vm853 = vweird.f32 %v846
        %vm854 = vmor %vm852, %vm853
        %v855 = vsel %vm854, %v846, %v851
        %v856 = vmul.f32 %v839, %v855
        %v858 = vperm.slane %v661, 0
        %v860 = vmul.f32 %v856, %v858
        %v862 = vperm.slane %v662, 0
        %v864 = vadd.f32 %v860, %v862
        %v865 = vmul.f32 %v864, 0.5
        %v866 = vmul.f32 %v864, 0.044715
        %v867 = vmul.f32 %v866, %v864
        %v868 = vmul.f32 %v867, %v864
        %v869 = vadd.f32 %v864, %v868
        %v870 = vmul.f32 %v869, 0.7978846
        %v871 = vtanh.pop %v870
        %v872 = vadd.f32 %v871, 1.0
        %v873 = vmul.f32 %v865, %v872
        %v874 = vadd.f32 %v734, %v873
        %v875 = vmul.f32 %v874, %v738
        %876 = vst.msk [vmem:[#allocation2 + $0x5] sm:$0xff] %vm741, %v875
        %v878 = vperm.slane %v666, 0
        %v880 = vadd.f32 %v878, 0.0
        %v881 = vld [vmem:[#allocation2] sm:$0xff]
        %v882 = vperm.slane %v664, 1
        %v883 = vmul.f32 %v881, %v882
        %v884 = vadd.f32 %v880, %v883
        %v885 = vld [vmem:[#allocation2 + $0x5] sm:$0xff]
        %v886 = vperm.slane %v664, 2
        %v887 = vmul.f32 %v885, %v886
        %v888 = vadd.f32 %v884, %v887
        %v889 = vld [vmem:[#allocation2 + $0xa] sm:$0xff]
        %v890 = vperm.slane %v664, 3
        %v891 = vmul.f32 %v889, %v890
        %v892 = vadd.f32 %v888, %v891
        %v893 = vsel %vm741, %v892, 0.0
        %894 = vadd.xlane.f32.xlu0 %v893
        %v895 = vpop.xlane.xlu0 %894
        %v896 = vmul.f32 %v895, %v776
        %v897 = vsub.f32 %v892, %v896
        %v898 = vmul.f32 %v897, %v897
        %v899 = vsel %vm741, %v898, 0.0
        %900 = vadd.xlane.f32.xlu0 %v899
        %v901 = vpop.xlane.xlu0 %900
        %v902 = vmul.f32 %v901, %v776
        %v903 = vadd.f32 %v902, 1e-05
        %v904 = vrsqrt.pop %v903
        %v905 = vmul.f32 %v904, %v903
        %v906 = vmul.f32 %v905, %v904
        %v907 = vmul.f32 0.5, %v906
        %v908 = vsub.f32 1.5, %v907
        %v909 = vmul.f32 %v904, %v908
        %vm910 = vweird.f32 %v903
        %vm911 = vweird.f32 %v904
        %vm912 = vmor %vm910, %vm911
        %v913 = vsel %vm912, %v904, %v909
        %v914 = vmul.f32 %v897, %v913
        %v916 = vperm.slane %v668, 0
        %v918 = vmul.f32 %v914, %v916
        %v920 = vperm.slane %v670, 0
        %v922 = vadd.f32 %v918, %v920
        %v923 = vmul.f32 %v922, 0.5
        %v924 = vmul.f32 %v922, 0.044715
        %v925 = vmul.f32 %v924, %v922
        %v926 = vmul.f32 %v925, %v922
        %v927 = vadd.f32 %v922, %v926
        %v928 = vmul.f32 %v927, 0.7978846
        %v929 = vtanh.pop %v928
        %v930 = vadd.f32 %v929, 1.0
        %v931 = vmul.f32 %v923, %v930
        %v932 = vpack.c.bf16 %v931, %v931
        %v933 = vpack.c.bf16 %v673, %v672
        %v934 = vpack.c.bf16 %v675, %v674
        %v936 = vperm.slane %v677, 0
        %v939 = vsel %vm741, %v932, 0
        %941 = vmatpush.bf16.msra.mxu0 0
        %942 = vmatpush.bf16.msra.mxu0 0
        %943 = vmatpush.bf16.msra.mxu0 0
        %944 = vmatpush.bf16.msra.mxu0 0
        %945 = vmatpush.bf16.msra.mxu0 0
        %946 = vmatpush.bf16.msra.mxu0 0
        %947 = vmatpush.bf16.msra.mxu0 %v934
        %948 = vmatpush.bf16.msra.mxu0 %v933
        %949 = vmatmul.bf16.gmra.mxu0 %v939
        %v950 = vpop.f32.mrf.mxu0
        %v951 = vadd.f32 %v936, %v950
        %v952 = vpop.f32.mrf.mxu0
        %953 = vdwg.mxu0
        %v954 = vsel %vm741, %v951, 0.0
        %955 = vadd.xlane.f32.xlu0 %v954
        %v956 = vpop.xlane.xlu0 %955
        %v957 = vmul.f32 %v956, %v776
        %v958 = vsub.f32 %v951, %v957
        %v959 = vmul.f32 %v958, %v958
        %v960 = vsel %vm741, %v959, 0.0
        %961 = vadd.xlane.f32.xlu0 %v960
        %v962 = vpop.xlane.xlu0 %961
        %v963 = vmul.f32 %v962, %v776
        %v964 = vadd.f32 %v963, 1e-05
        %v965 = vrsqrt.pop %v964
        %v966 = vmul.f32 %v965, %v964
        %v967 = vmul.f32 %v966, %v965
        %v968 = vmul.f32 0.5, %v967
        %v969 = vsub.f32 1.5, %v968
        %v970 = vmul.f32 %v965, %v969
        %vm971 = vweird.f32 %v964
        %vm972 = vweird.f32 %v965
        %vm973 = vmor %vm971, %vm972
        %v974 = vsel %vm973, %v965, %v970
        %v975 = vmul.f32 %v958, %v974
        %v977 = vperm.slane %v679, 0
        %v979 = vmul.f32 %v975, %v977
        %v981 = vperm.slane %v681, 0
        %v983 = vadd.f32 %v979, %v981
        %v984 = vmul.f32 %v983, 0.5
        %v985 = vmul.f32 %v983, 0.044715
        %v986 = vmul.f32 %v985, %v983
        %v987 = vmul.f32 %v986, %v983
        %v988 = vadd.f32 %v983, %v987
        %v989 = vmul.f32 %v988, 0.7978846
        %v990 = vtanh.pop %v989
        %v991 = vadd.f32 %v990, 1.0
        %v992 = vmul.f32 %v984, %v991
        %v993 = vadd.f32 %v874, %v992
        %v994 = vmul.f32 %v993, %v738
        %995 = vst.msk [vmem:[#allocation2 + $0x5] sm:$0xff] %vm741, %v994
        %v997 = vperm.slane %v685, 0
        %v999 = vadd.f32 %v997, 0.0
        %v1000 = vld [vmem:[#allocation2 + $0x5] sm:$0xff]
        %v1001 = vperm.slane %v683, 2
        %v1002 = vmul.f32 %v1000, %v1001
        %v1003 = vadd.f32 %v999, %v1002
        %v1004 = vsel %vm741, %v1003, 0.0
        %1005 = vadd.xlane.f32.xlu0 %v1004
        %v1006 = vpop.xlane.xlu0 %1005
        %v1007 = vmul.f32 %v1006, %v776
        %v1008 = vsub.f32 %v1003, %v1007
        %v1009 = vmul.f32 %v1008, %v1008
        %v1010 = vsel %vm741, %v1009, 0.0
        %1011 = vadd.xlane.f32.xlu0 %v1010
        %v1012 = vpop.xlane.xlu0 %1011
        %v1013 = vmul.f32 %v1012, %v776
        %v1014 = vadd.f32 %v1013, 1e-05
        %v1015 = vrsqrt.pop %v1014
        %v1016 = vmul.f32 %v1015, %v1014
        %v1017 = vmul.f32 %v1016, %v1015
        %v1018 = vmul.f32 0.5, %v1017
        %v1019 = vsub.f32 1.5, %v1018
        %v1020 = vmul.f32 %v1015, %v1019
        %vm1021 = vweird.f32 %v1014
        %vm1022 = vweird.f32 %v1015
        %vm1023 = vmor %vm1021, %vm1022
        %v1024 = vsel %vm1023, %v1015, %v1020
        %v1025 = vmul.f32 %v1008, %v1024
        %v1027 = vperm.slane %v687, 0
        %v1029 = vmul.f32 %v1025, %v1027
        %v1031 = vperm.slane %v689, 0
        %v1033 = vadd.f32 %v1029, %v1031
        %v1034 = vmul.f32 %v1033, 0.5
        %v1035 = vmul.f32 %v1033, 0.044715
        %v1036 = vmul.f32 %v1035, %v1033
        %v1037 = vmul.f32 %v1036, %v1033
        %v1038 = vadd.f32 %v1033, %v1037
        %v1039 = vmul.f32 %v1038, 0.7978846
        %v1040 = vtanh.pop %v1039
        %v1041 = vadd.f32 %v1040, 1.0
        %v1042 = vmul.f32 %v1034, %v1041
        %v1043 = vpack.c.bf16 %v1042, %v1042
        %v1044 = vpack.c.bf16 %v692, %v691
        %v1045 = vpack.c.bf16 %v694, %v693
        %v1047 = vperm.slane %v696, 0
        %v1050 = vsel %vm741, %v1043, 0
        %1052 = vmatpush.bf16.msra.mxu0 0
        %1053 = vmatpush.bf16.msra.mxu0 0
        %1054 = vmatpush.bf16.msra.mxu0 0
        %1055 = vmatpush.bf16.msra.mxu0 0
        %1056 = vmatpush.bf16.msra.mxu0 0
        %1057 = vmatpush.bf16.msra.mxu0 0
        %1058 = vmatpush.bf16.msra.mxu0 %v1045
        %1059 = vmatpush.bf16.msra.mxu0 %v1044
        %1060 = vmatmul.bf16.gmra.mxu0 %v1050
        %v1061 = vpop.f32.mrf.mxu0
        %v1062 = vadd.f32 %v1047, %v1061
        %v1063 = vpop.f32.mrf.mxu0
        %1064 = vdwg.mxu0
        %v1065 = vsel %vm741, %v1062, 0.0
        %1066 = vadd.xlane.f32.xlu0 %v1065
        %v1067 = vpop.xlane.xlu0 %1066
        %v1068 = vmul.f32 %v1067, %v776
        %v1069 = vsub.f32 %v1062, %v1068
        %v1070 = vmul.f32 %v1069, %v1069
        %v1071 = vsel %vm741, %v1070, 0.0
        %1072 = vadd.xlane.f32.xlu0 %v1071
        %v1073 = vpop.xlane.xlu0 %1072
        %v1074 = vmul.f32 %v1073, %v776
        %v1075 = vadd.f32 %v1074, 1e-05
        %v1076 = vrsqrt.pop %v1075
        %v1077 = vmul.f32 %v1076, %v1075
        %v1078 = vmul.f32 %v1077, %v1076
        %v1079 = vmul.f32 0.5, %v1078
        %v1080 = vsub.f32 1.5, %v1079
        %v1081 = vmul.f32 %v1076, %v1080
        %vm1082 = vweird.f32 %v1075
        %vm1083 = vweird.f32 %v1076
        %vm1084 = vmor %vm1082, %vm1083
        %v1085 = vsel %vm1084, %v1076, %v1081
        %v1086 = vmul.f32 %v1069, %v1085
        %v1088 = vperm.slane %v698, 0
        %v1090 = vmul.f32 %v1086, %v1088
        %v1092 = vperm.slane %v700, 0
        %v1094 = vadd.f32 %v1090, %v1092
        %v1095 = vmul.f32 %v1094, 0.5
        %v1096 = vmul.f32 %v1094, 0.044715
        %v1097 = vmul.f32 %v1096, %v1094
        %v1098 = vmul.f32 %v1097, %v1094
        %v1099 = vadd.f32 %v1094, %v1098
        %v1100 = vmul.f32 %v1099, 0.7978846
        %v1101 = vtanh.pop %v1100
        %v1102 = vadd.f32 %v1101, 1.0
        %v1103 = vmul.f32 %v1095, %v1102
        %v1104 = vadd.f32 %v993, %v1103
        %v1105 = vmul.f32 %v1104, %v738
        %v1106 = vpack.c.bf16 %v1105, %v1105
        %v1107 = vpack.c.bf16 %v708, %v707
        %v1108 = vpack.c.bf16 %v710, %v709
        %v1110 = vperm.slane %v711, 0
        %v1113 = vsel %vm741, %v1106, 0
        %1115 = vmatpush.bf16.msra.mxu0 0
        %1116 = vmatpush.bf16.msra.mxu0 0
        %1117 = vmatpush.bf16.msra.mxu0 0
        %1118 = vmatpush.bf16.msra.mxu0 0
        %1119 = vmatpush.bf16.msra.mxu0 0
        %1120 = vmatpush.bf16.msra.mxu0 0
        %1121 = vmatpush.bf16.msra.mxu0 %v1108
        %1122 = vmatpush.bf16.msra.mxu0 %v1107
        %1123 = vmatmul.bf16.gmra.mxu0 %v1113
        %v1124 = vpop.f32.mrf.mxu0
        %v1125 = vadd.f32 %v1110, %v1124
        %v1126 = vpop.f32.mrf.mxu0
        %1127 = vdwg.mxu0
        %v1128 = vmul.f32 %v1125, %v738
        %1129 = vst.msk [vmem:[%s643] sm:$0xff] %vm741, %v1128
        %s1130 = sand.u32 %s375, 1
        %s1131 = scalar_lea.sflag [#allocation5], %s1130
        %s1132 = sand.u32 %s375, 1
        %s1133 = smul.addr %s1132, 8
        %s1134 = scalar_lea.vmem [#allocation15], %s1133
        // Predicated region
        $region109: #{_lambda_.1} parent=79 // pred_check
          %p1135 = pneg %p385
        $region110: #{_lambda_.1} parent=79 // pred_check_branch
          %1137 = sbr.rel (%p1135) target = $region112
        $region111: #{_lambda_.1} parent=79 // pred_region
          %1139 = vsyncadd %s1131, 0
          %s1140 = smul.addr %s37, 8
          %s1141 = scalar_lea.hbm %s15, %s1140
          %s1143 = sshll.u32 %s1134, 4
          %s1144 = int_to_ptr.vmem [resolvable:$true] %s1143
          %s1145 = sshll.u32 %s1141, 4
          %s1146 = int_to_ptr.hbm [resolvable:$true] %s1145
          %1148 = dma.vmem_to_hbm [thread:$0]  %s1144, 128, %s1146, %s1131
        $region112: #{_lambda_.1} parent=79 // pred_fallthru
          _
      $region80: #{_lambda_.1} parent=5 // pred_fallthru
        _
      %p1149 = scmp.le.s32.totalorder 2, %s32
      // Predicated region
      $region113: #{_lambda_.1} parent=5 // pred_check
        %p1150 = pneg %p1149
      $region114: #{_lambda_.1} parent=5 // pred_check_branch
        %1152 = sbr.rel (%p1150) target = $region116
      $region115: #{_lambda_.1} parent=5 // pred_region
        %s1153 = ssub.s32 %s32, 2
        // Predicated region
        $region117: #{_lambda_.1} parent=115 // pred_check
          %p1154 = pneg %p391
        $region118: #{_lambda_.1} parent=115 // pred_check_branch
          %1156 = sbr.rel (%p1154) target = $region120
        $region119: #{_lambda_.1} parent=115 // pred_region
          %s1157 = sand.u32 %s376, 1
          %s1158 = scalar_lea.sflag [#allocation5], %s1157
          %s1159 = sand.u32 %s376, 1
          %s1160 = smul.addr %s1159, 8
          %s1161 = scalar_lea.vmem [#allocation15], %s1160
          %1163 = dma.done %s1158, 128
        $region120: #{_lambda_.1} parent=115 // pred_fallthru
          _
      $region116: #{_lambda_.1} parent=5 // pred_fallthru
        _
    $region6: #{_lambda_.1} parent=1 // loop_footer
      %s36 = sadd.s32 1, %s32
    $region7: #{_lambda_.1} parent=1 // loop_footer_branch
      %31 = sbr.rel target = $region3
    $region8: #{_lambda_.1} parent=1 // loop_exit
      _
    %1164 = vsyncpa [#allocation4], 1
    %s1165 = scalar_lea.sflag [#allocation4], 1
    %1166 = vsyncpa %s1165, 1
    %1167 = vsyncpa [#allocation7], 1
    %s1168 = scalar_lea.sflag [#allocation7], 1
    %1169 = vsyncpa %s1168, 1
    %1170 = vsyncpa [#allocation10], 1
    %1171 = vsyncpa [#allocation13], 1
    %1172 = vsyncpa [#allocation5], 1
    %s1173 = scalar_lea.sflag [#allocation5], 1
    %1174 = vsyncpa %s1173, 1

</llo_original>
